<compile_context>
chip_gen: v5e
topology: v5e:2x2
jax: 0.10.0
libtpu: 0.0.40
codegen_flags: <defaults>
</compile_context>

<pallas_src>
import functools

import jax
import jax.numpy as jnp
import numpy as np
from jax.experimental import pallas as pl
from jax.experimental.pallas import tpu as pltpu

_LANE = 128


def _round_up_lanes(n):
    return -(-n // _LANE) * _LANE


def _vmem_budget_bytes():
    """Generation-aware VMEM budget: half of physical capacity, capped at 64 MiB.
    v5e/v6e (128 MiB) -> 64 MiB; v7x (64 MiB) -> 32 MiB; falls back to the
    conservative v7x setting if the query is unavailable."""
    cap = 64 * 1024 * 1024
    try:
        cap = int(getattr(pltpu.get_tpu_info(), "vmem_capacity_bytes", cap))
    except Exception:
        pass
    return int(min(cap // 2, 64 * 1024 * 1024))


def _pick_block_images(N, Hp, L_in, Ho, L_out, hP, L_pool, KH, budget_bytes):
    """Largest divisor Nb of N, capped at N//2 (so the 'parallel' grid axis has
    >= 2 steps and both v7x TensorCores are busy), whose honest per-step VMEM
    footprint fits in 75% of budget_bytes (25% headroom for compiler scratch,
    sublane padding and pipelining slack).  Every VMEM-resident buffer is
    counted with its lane dim padded to 128."""
    li, lo, lq = map(_round_up_lanes, (L_in, L_out, L_pool))
    per_img = (
        2 * Hp * li * 2        # kernel-1 x block, bf16, double-buffered
        + 2 * Ho * li * 2      # two live per-kh sublane-sliced GEMM LHS copies
        + Ho * lo * 4          # f32 GEMM accumulator
        + 2 * Ho * lo * 2      # y block, bf16, double-buffered (both kernels)
        + 2 * Ho * lo * 2      # kernel-2 affine / pool temporaries, bf16
        + 2 * hP * lq * 2      # pooled output block, bf16, double-buffered
    )
    fixed = 2 * KH * L_in * lo * 2 + 8 * lo * 4   # banded weights + scale/shift/stats
    usable = int(budget_bytes * 0.75) - fixed
    cap = max(1, N // 2)
    nb = int(max(1, min(cap, usable // max(per_img, 1))))
    while N % nb:                                  # keep BN stats / blocks exact
        nb -= 1
    return nb


def _conv_stats_kernel(x_ref, w_ref, y_ref, s1_ref, s2_ref, *, KH, Ho):
    """Conv2d as KH lane-dense GEMMs against a block-banded weight, plus
    per-grid-block BN partial sums (grid axis stays 'parallel')."""
    Nb, Hp, L_in = x_ref.shape
    L_out = w_ref.shape[-1]

    acc = jnp.zeros((Nb * Ho, L_out), jnp.float32)
    for kh in range(KH):                           # static unroll, KH is tiny
        # Pure sublane slice: the lane dim (W*Cin packed by the wrapper) is
        # untouched, so there is no im2col, concat or lane relayout here.
        lhs = x_ref[:, kh:kh + Ho, :].reshape(Nb * Ho, L_in)
        acc = acc + jnp.dot(lhs, w_ref[kh], preferred_element_type=jnp.float32)

    # BN partial sums: one row per block; the tiny (G, Wo, Cout) reduction
    # happens in the wrapper.  (E[x^2]-E[x]^2 in f32 — see wrapper note.)
    s1_ref[...] = jnp.sum(acc, axis=0, keepdims=True).reshape(1, 1, L_out)
    s2_ref[...] = jnp.sum(acc * acc, axis=0, keepdims=True).reshape(1, 1, L_out)

    # Lane-packed (wo, co) store: no channel padding reaches HBM.
    y_ref[...] = acc.reshape(Nb, Ho, L_out).astype(y_ref.dtype)


def _bn_pool_relu_kernel(y_ref, scale_ref, shift_ref, o_ref, *, hP, wP, Cout):
    """BN affine -> 2x2/2 max-pool -> ReLU, bf16 throughout (v6e/v7x bf16 VALU;
    v5e upconverts internally, still correct)."""
    Nb, Ho, L_out = y_ref.shape
    half = wP * Cout

    v = y_ref[...] * scale_ref[...] + shift_ref[...]          # bf16 affine
    # H pool: adjacent sublane rows (lane dim untouched).
    v = v[:, :2 * hP, :].reshape(Nb, hP, 2, L_out)
    a = jnp.maximum(v[:, :, 0, :], v[:, :, 1, :])              # (Nb, hP, L_out)
    # W pool: kernel 1 stored even-wo columns in lanes [0, wP*Cout) and odd-wo
    # columns in lanes [wP*Cout, 2*wP*Cout), so this is two plain lane slices.
    p = jnp.maximum(a[:, :, :half], a[:, :, half:2 * half])    # (Nb, hP, wP*Cout)
    # ReLU after pooling (commutes with max; affine must stay first since
    # gamma can be negative).
    o_ref[...] = jnp.maximum(p, 0.0).astype(o_ref.dtype)


def time_distributed_conv2d(x, w, b, gamma, beta, *, stride=1, padding=0,
                            eps=1e-5):
    """Pallas TPU implementation of TimeDistributedConv2D.forward."""
    B, T, Cin, H, W = x.shape
    Cout, Cin_w, KH, KW = w.shape
    assert Cin_w == Cin
    assert stride == 1  # TODO(synk): stride > 1 needs a strided banded weight / row step
    N = B * T
    Hp, Wp = H + 2 * padding, W + 2 * padding
    Ho, Wo = Hp - KH + 1, Wp - KW + 1
    hP, wP = Ho // 2, Wo // 2
    L_in, L_out, L_pool = Wp * Cin, Wo * Cout, wP * Cout

    # glue (one fused XLA pass): fold time, NCHW->NHWC, zero-pad, bf16 cast,
    # flatten (W, Cin) into the lane axis so every kernel load is lane-dense.
    # TODO(synk): fold this relayout into kernel 1 (halo index_map on raw NCHW)
    # to save one HBM round trip of x.
    xr = jnp.transpose(x.reshape(N, Cin, H, W), (0, 2, 3, 1))
    xp = jnp.pad(xr, ((0, 0), (padding, padding), (padding, padding), (0, 0)))
    x_flat = xp.astype(jnp.bfloat16).reshape(N, Hp, L_in)

    # Block-banded weight: band[kh, wp*Cin+ci, j*Cout+co] = w[co, ci, kh, wp-wo]
    # for wp = wo_order[j] + kw (0 elsewhere).  Output columns are permuted to
    # [even wo | odd wo | leftover] so kernel 2's W-pool is two lane slices.
    wo_order = np.concatenate([np.arange(0, 2 * wP, 2),
                               np.arange(1, 2 * wP, 2),
                               np.arange(2 * wP, Wo)])
    sel = np.zeros((KW, Wp, Wo), np.float32)
    for kw_i in range(KW):
        sel[kw_i, wo_order + kw_i, np.arange(Wo)] = 1.0
    band = jnp.einsum("kpj,oihk->hpijo", sel, w.astype(jnp.float32))
    band = band.reshape(KH, L_in, L_out).astype(jnp.bfloat16)

    budget = _vmem_budget_bytes()
    Nb = _pick_block_images(N, Hp, L_in, Ho, L_out, hP, L_pool, KH, budget)
    G = N // Nb

    # kernel 1: conv GEMM + per-block BN partial sums
    y, s1, s2 = pl.pallas_call(
        functools.partial(_conv_stats_kernel, KH=KH, Ho=Ho),
        out_shape=(jax.ShapeDtypeStruct((N, Ho, L_out), jnp.bfloat16),
                   jax.ShapeDtypeStruct((G, 1, L_out), jnp.float32),
                   jax.ShapeDtypeStruct((G, 1, L_out), jnp.float32)),
        grid_spec=pltpu.PrefetchScalarGridSpec(
            num_scalar_prefetch=0,
            grid=(G,),
            in_specs=[
                pl.BlockSpec((Nb, Hp, L_in), lambda g: (g, 0, 0)),
                pl.BlockSpec((KH, L_in, L_out), lambda g: (0, 0, 0)),
            ],
            out_specs=(
                pl.BlockSpec((Nb, Ho, L_out), lambda g: (g, 0, 0)),
                pl.BlockSpec((1, 1, L_out), lambda g: (g, 0, 0)),
                pl.BlockSpec((1, 1, L_out), lambda g: (g, 0, 0)),
            )),
        compiler_params=pltpu.CompilerParams(
            dimension_semantics=("parallel",),
            vmem_limit_bytes=budget),
    )(x_flat, band)

    # tiny scalar glue (f32): train-mode batch stats -> per-channel affine.
    # NOTE: E[x^2]-E[x]^2 can cancel when |mean| >> std; clamped at 0 below
    # (a two-pass/shifted formulation would be safer but costs another pass).
    cnt = jnp.float32(N * Ho * Wo)
    ssum = jnp.sum(s1[:, 0, :], axis=0).reshape(Wo, Cout).sum(axis=0)
    ssq = jnp.sum(s2[:, 0, :], axis=0).reshape(Wo, Cout).sum(axis=0)
    mean = ssum / cnt
    var = jnp.maximum(ssq / cnt - mean * mean, 0.0)   # biased var (PyTorch BN)
    inv = jax.lax.rsqrt(var + eps)
    # The conv bias `b` shifts the batch mean by exactly b and leaves the
    # variance unchanged, so it cancels exactly out of train-mode BN:
    # applying (scale, shift) below to the bias-free conv output equals
    # conv + b -> BN(batch stats) -> gamma/beta.  (Running-stat updates are
    # module state, not part of the forward output.)
    scale = gamma.astype(jnp.float32) * inv
    shift = beta.astype(jnp.float32) - mean * scale
    scale_l = jnp.tile(scale, Wo).reshape(1, 1, L_out).astype(jnp.bfloat16)
    shift_l = jnp.tile(shift, Wo).reshape(1, 1, L_out).astype(jnp.bfloat16)

    # kernel 2: BN affine -> MaxPool2d(2, 2) -> ReLU (bf16 in / bf16 out)
    pooled = pl.pallas_call(
        functools.partial(_bn_pool_relu_kernel, hP=hP, wP=wP, Cout=Cout),
        out_shape=jax.ShapeDtypeStruct((N, hP, L_pool), jnp.bfloat16),
        grid_spec=pltpu.PrefetchScalarGridSpec(
            num_scalar_prefetch=0,
            grid=(G,),
            in_specs=[
                pl.BlockSpec((Nb, Ho, L_out), lambda g: (g, 0, 0)),
                pl.BlockSpec((1, 1, L_out), lambda g: (0, 0, 0)),
                pl.BlockSpec((1, 1, L_out), lambda g: (0, 0, 0)),
            ],
            out_specs=pl.BlockSpec((Nb, hP, L_pool), lambda g: (g, 0, 0))),
        compiler_params=pltpu.CompilerParams(
            dimension_semantics=("parallel",),
            vmem_limit_bytes=budget),
    )(y, scale_l, shift_l)

    # glue: unpack lanes, NHWC -> NCHW, unfold time
    out = pooled.reshape(N, hP, wP, Cout)
    out = jnp.transpose(out, (0, 3, 1, 2)).reshape(B, T, Cout, hP, wP)
    return out.astype(x.dtype)


def _reference(x, w, b, gamma, beta, *, stride=1, padding=0, eps=1e-5):
    """Pure-JAX f32 reference matching the PyTorch forward (train-mode BN)."""
    B, T, Cin, H, W = x.shape
    xr = x.reshape(B * T, Cin, H, W)
    y = jax.lax.conv_general_dilated(
        xr, w, (stride, stride),
        [(padding, padding), (padding, padding)],
        dimension_numbers=('NCHW', 'OIHW', 'NCHW'))
    y = y + b[None, :, None, None]
    mean = y.mean(axis=(0, 2, 3), keepdims=True)
    var = ((y - mean) ** 2).mean(axis=(0, 2, 3), keepdims=True)
    yn = (y - mean) * jax.lax.rsqrt(var + eps)
    yn = yn * gamma[None, :, None, None] + beta[None, :, None, None]
    r = jnp.maximum(yn, 0.0)
    Nn, C, Ho, Wo = r.shape
    r = r[:, :, :Ho // 2 * 2, :Wo // 2 * 2]
    r = r.reshape(Nn, C, Ho // 2, 2, Wo // 2, 2).max(axis=(3, 5))
    return r.reshape(B, T, C, Ho // 2, Wo // 2)


if __name__ == "__main__":
    key = jax.random.PRNGKey(0)
    B, T, Cin, H, W = 2, 3, 4, 16, 16
    Cout, K, stride, padding = 8, 3, 1, 1

    kx, kw, kb, kg, kbeta = jax.random.split(key, 5)
    x = jax.random.normal(kx, (B, T, Cin, H, W), jnp.float32)
    w = 0.1 * jax.random.normal(kw, (Cout, Cin, K, K), jnp.float32)
    b = 0.1 * jax.random.normal(kb, (Cout,), jnp.float32)
    gamma = 1.0 + 0.1 * jax.random.normal(kg, (Cout,), jnp.float32)
    beta = 0.1 * jax.random.normal(kbeta, (Cout,), jnp.float32)

    fn = jax.jit(functools.partial(time_distributed_conv2d,
                                   stride=stride, padding=padding))
    out = jax.block_until_ready(fn(x, w, b, gamma, beta))

    ref = _reference(x, w, b, gamma, beta, stride=stride, padding=padding)
    assert out.shape == (B, T, Cout, H // 2, W // 2), out.shape
    # bf16 transport + bf16 epilogue (per perf review) vs an f32 reference:
    # tolerance sized for bf16 rounding; structural bugs would blow past it.
    np.testing.assert_allclose(np.asarray(out), np.asarray(ref),
                               rtol=5e-2, atol=5e-2)
    print("KERNEL_OK")
</pallas_src>

<mosaic_0001>
module attributes {stable_mosaic.version = 11 : i64} {
  func.func @_conv_stats_kernel(%arg0: i32, %arg1: memref<3x18x72xbf16, #tpu.memory_space<vmem>>, %arg2: memref<3x72x128xbf16, #tpu.memory_space<vmem>>, %arg3: memref<3x16x128xbf16, #tpu.memory_space<vmem>>, %arg4: memref<1x1x128xf32, #tpu.memory_space<vmem>>, %arg5: memref<1x1x128xf32, #tpu.memory_space<vmem>>) attributes {dimension_semantics = [#tpu.dimension_semantics<parallel>], iteration_bounds = array<i64: 2>, scalar_prefetch = 0 : i64, scratch_operands = 0 : i64, tpu.core_type = #tpu.core_type<tc>, window_params = [{transform_indices = @transform_0, window_bounds = array<i64: 3, 18, 72>}, {pipeline_mode = #tpu.pipeline_mode<synchronous>, transform_indices = @transform_1, window_bounds = array<i64: 3, 72, 128>}, {transform_indices = @transform_2, window_bounds = array<i64: 3, 16, 128>}, {transform_indices = @transform_3, window_bounds = array<i64: 1, 1, 128>}, {transform_indices = @transform_4, window_bounds = array<i64: 1, 1, 128>}]} {
    %cst = arith.constant 0.000000e+00 : f32
    %0 = vector.broadcast %cst : f32 to vector<48x128xf32>
    %c0 = arith.constant 0 : index
    %c0_0 = arith.constant 0 : index
    %c0_1 = arith.constant 0 : index
    %1 = vector.load %arg1[%c0, %c0_0, %c0_1] : memref<3x18x72xbf16, #tpu.memory_space<vmem>>, vector<3x16x72xbf16>
    %2 = vector.shape_cast %1 : vector<3x16x72xbf16> to vector<48x72xbf16>
    %c0_2 = arith.constant 0 : index
    %c0_3 = arith.constant 0 : index
    %c0_4 = arith.constant 0 : index
    %3 = vector.load %arg2[%c0_2, %c0_3, %c0_4] : memref<3x72x128xbf16, #tpu.memory_space<vmem>>, vector<1x72x128xbf16>
    %4 = vector.shape_cast %3 : vector<1x72x128xbf16> to vector<72x128xbf16>
    %cst_5 = arith.constant dense<0.000000e+00> : vector<48x128xf32>
    %5 = tpu.matmul %2, %4, %cst_5 {dimension_numbers = #tpu.dot_dimension_numbers<[1], [0], [0], [1], [0, 0, 1, 1], [], []>} : vector<48x72xbf16>, vector<72x128xbf16>, vector<48x128xf32> -> vector<48x128xf32>
    %6 = arith.addf %0, %5 : vector<48x128xf32>
    %c0_6 = arith.constant 0 : index
    %c1 = arith.constant 1 : index
    %c0_7 = arith.constant 0 : index
    %7 = vector.load %arg1[%c0_6, %c1, %c0_7] : memref<3x18x72xbf16, #tpu.memory_space<vmem>>, vector<3x16x72xbf16>
    %8 = vector.shape_cast %7 : vector<3x16x72xbf16> to vector<48x72xbf16>
    %c1_8 = arith.constant 1 : index
    %c0_9 = arith.constant 0 : index
    %c0_10 = arith.constant 0 : index
    %9 = vector.load %arg2[%c1_8, %c0_9, %c0_10] : memref<3x72x128xbf16, #tpu.memory_space<vmem>>, vector<1x72x128xbf16>
    %10 = vector.shape_cast %9 : vector<1x72x128xbf16> to vector<72x128xbf16>
    %cst_11 = arith.constant dense<0.000000e+00> : vector<48x128xf32>
    %11 = tpu.matmul %8, %10, %cst_11 {dimension_numbers = #tpu.dot_dimension_numbers<[1], [0], [0], [1], [0, 0, 1, 1], [], []>} : vector<48x72xbf16>, vector<72x128xbf16>, vector<48x128xf32> -> vector<48x128xf32>
    %12 = arith.addf %6, %11 : vector<48x128xf32>
    %c0_12 = arith.constant 0 : index
    %c2 = arith.constant 2 : index
    %c0_13 = arith.constant 0 : index
    %13 = vector.load %arg1[%c0_12, %c2, %c0_13] : memref<3x18x72xbf16, #tpu.memory_space<vmem>>, vector<3x16x72xbf16>
    %14 = vector.shape_cast %13 : vector<3x16x72xbf16> to vector<48x72xbf16>
    %c2_14 = arith.constant 2 : index
    %c0_15 = arith.constant 0 : index
    %c0_16 = arith.constant 0 : index
    %15 = vector.load %arg2[%c2_14, %c0_15, %c0_16] : memref<3x72x128xbf16, #tpu.memory_space<vmem>>, vector<1x72x128xbf16>
    %16 = vector.shape_cast %15 : vector<1x72x128xbf16> to vector<72x128xbf16>
    %cst_17 = arith.constant dense<0.000000e+00> : vector<48x128xf32>
    %17 = tpu.matmul %14, %16, %cst_17 {dimension_numbers = #tpu.dot_dimension_numbers<[1], [0], [0], [1], [0, 0, 1, 1], [], []>} : vector<48x72xbf16>, vector<72x128xbf16>, vector<48x128xf32> -> vector<48x128xf32>
    %18 = arith.addf %12, %17 : vector<48x128xf32>
    %cst_18 = arith.constant dense<0.000000e+00> : vector<128xf32>
    %19 = vector.multi_reduction <add>, %18, %cst_18 [0] : vector<48x128xf32> to vector<128xf32>
    %20 = vector.shape_cast %19 : vector<128xf32> to vector<1x128xf32>
    %21 = vector.shape_cast %20 : vector<1x128xf32> to vector<1x1x128xf32>
    %c0_19 = arith.constant 0 : index
    %c0_20 = arith.constant 0 : index
    %c0_21 = arith.constant 0 : index
    %22 = vector.load %arg4[%c0_19, %c0_20, %c0_21] : memref<1x1x128xf32, #tpu.memory_space<vmem>>, vector<1x1x128xf32>
    tpu.vector_store %arg4[%c0_19, %c0_20, %c0_21], %21 {strides = array<i32>} : memref<1x1x128xf32, #tpu.memory_space<vmem>>, vector<1x1x128xf32>,
    %23 = arith.mulf %18, %18 : vector<48x128xf32>
    %cst_22 = arith.constant dense<0.000000e+00> : vector<128xf32>
    %24 = vector.multi_reduction <add>, %23, %cst_22 [0] : vector<48x128xf32> to vector<128xf32>
    %25 = vector.shape_cast %24 : vector<128xf32> to vector<1x128xf32>
    %26 = vector.shape_cast %25 : vector<1x128xf32> to vector<1x1x128xf32>
    %c0_23 = arith.constant 0 : index
    %c0_24 = arith.constant 0 : index
    %c0_25 = arith.constant 0 : index
    %27 = vector.load %arg5[%c0_23, %c0_24, %c0_25] : memref<1x1x128xf32, #tpu.memory_space<vmem>>, vector<1x1x128xf32>
    tpu.vector_store %arg5[%c0_23, %c0_24, %c0_25], %26 {strides = array<i32>} : memref<1x1x128xf32, #tpu.memory_space<vmem>>, vector<1x1x128xf32>,
    %28 = vector.shape_cast %18 : vector<48x128xf32> to vector<3x16x128xf32>
    %29 = arith.truncf %28 : vector<3x16x128xf32> to vector<3x16x128xbf16>
    %c0_26 = arith.constant 0 : index
    %c0_27 = arith.constant 0 : index
    %c0_28 = arith.constant 0 : index
    %30 = vector.load %arg3[%c0_26, %c0_27, %c0_28] : memref<3x16x128xbf16, #tpu.memory_space<vmem>>, vector<3x16x128xbf16>
    tpu.vector_store %arg3[%c0_26, %c0_27, %c0_28], %29 {strides = array<i32>} : memref<3x16x128xbf16, #tpu.memory_space<vmem>>, vector<3x16x128xbf16>,
    return
  }
  func.func @transform_0(%arg0: i32) -> (i32, i32, i32) {
    %c0_i32 = arith.constant 0 : i32
    %c0_i32_0 = arith.constant 0 : i32
    %c0_i32_1 = arith.constant 0 : i32
    return %arg0, %c0_i32, %c0_i32_0 : i32, i32, i32
  }
  func.func @transform_1(%arg0: i32) -> (i32, i32, i32) {
    %c0_i32 = arith.constant 0 : i32
    %c0_i32_0 = arith.constant 0 : i32
    %c0_i32_1 = arith.constant 0 : i32
    %c0_i32_2 = arith.constant 0 : i32
    return %c0_i32, %c0_i32_0, %c0_i32_1 : i32, i32, i32
  }
  func.func @transform_2(%arg0: i32) -> (i32, i32, i32) {
    %c0_i32 = arith.constant 0 : i32
    %c0_i32_0 = arith.constant 0 : i32
    %c0_i32_1 = arith.constant 0 : i32
    return %arg0, %c0_i32, %c0_i32_0 : i32, i32, i32
  }
  func.func @transform_3(%arg0: i32) -> (i32, i32, i32) {
    %c0_i32 = arith.constant 0 : i32
    %c0_i32_0 = arith.constant 0 : i32
    %c0_i32_1 = arith.constant 0 : i32
    return %arg0, %c0_i32, %c0_i32_0 : i32, i32, i32
  }
  func.func @transform_4(%arg0: i32) -> (i32, i32, i32) {
    %c0_i32 = arith.constant 0 : i32
    %c0_i32_0 = arith.constant 0 : i32
    %c0_i32_1 = arith.constant 0 : i32
    return %arg0, %c0_i32, %c0_i32_0 : i32, i32, i32
  }
}

module attributes {stable_mosaic.version = 11 : i64} {
  func.func @_bn_pool_relu_kernel(%arg0: i32, %arg1: memref<3x16x128xbf16, #tpu.memory_space<vmem>>, %arg2: memref<1x1x128xbf16, #tpu.memory_space<vmem>>, %arg3: memref<1x1x128xbf16, #tpu.memory_space<vmem>>, %arg4: memref<3x8x64xbf16, #tpu.memory_space<vmem>>) attributes {dimension_semantics = [#tpu.dimension_semantics<parallel>], iteration_bounds = array<i64: 2>, scalar_prefetch = 0 : i64, scratch_operands = 0 : i64, tpu.core_type = #tpu.core_type<tc>, window_params = [{transform_indices = @transform_0, window_bounds = array<i64: 3, 16, 128>}, {pipeline_mode = #tpu.pipeline_mode<synchronous>, transform_indices = @transform_1, window_bounds = array<i64: 1, 1, 128>}, {pipeline_mode = #tpu.pipeline_mode<synchronous>, transform_indices = @transform_2, window_bounds = array<i64: 1, 1, 128>}, {transform_indices = @transform_3, window_bounds = array<i64: 3, 8, 64>}]} {
    %c0 = arith.constant 0 : index
    %c0_0 = arith.constant 0 : index
    %c0_1 = arith.constant 0 : index
    %0 = vector.load %arg1[%c0, %c0_0, %c0_1] : memref<3x16x128xbf16, #tpu.memory_space<vmem>>, vector<3x16x128xbf16>
    %c0_2 = arith.constant 0 : index
    %c0_3 = arith.constant 0 : index
    %c0_4 = arith.constant 0 : index
    %1 = vector.load %arg2[%c0_2, %c0_3, %c0_4] : memref<1x1x128xbf16, #tpu.memory_space<vmem>>, vector<1x1x128xbf16>
    %2 = vector.broadcast %1 : vector<1x1x128xbf16> to vector<3x16x128xbf16>
    %3 = arith.mulf %0, %2 : vector<3x16x128xbf16>
    %c0_5 = arith.constant 0 : index
    %c0_6 = arith.constant 0 : index
    %c0_7 = arith.constant 0 : index
    %4 = vector.load %arg3[%c0_5, %c0_6, %c0_7] : memref<1x1x128xbf16, #tpu.memory_space<vmem>>, vector<1x1x128xbf16>
    %5 = vector.broadcast %4 : vector<1x1x128xbf16> to vector<3x16x128xbf16>
    %6 = arith.addf %3, %5 : vector<3x16x128xbf16>
    %7 = vector.shape_cast %6 : vector<3x16x128xbf16> to vector<3x8x2x128xbf16>
    %8 = vector.extract_strided_slice %7 {offsets = [0, 0, 0, 0], sizes = [3, 8, 1, 128], strides = [1, 1, 1, 1]} : vector<3x8x2x128xbf16> to vector<3x8x1x128xbf16>
    %9 = vector.shape_cast %8 : vector<3x8x1x128xbf16> to vector<3x8x128xbf16>
    %10 = vector.extract_strided_slice %7 {offsets = [0, 0, 1, 0], sizes = [3, 8, 1, 128], strides = [1, 1, 1, 1]} : vector<3x8x2x128xbf16> to vector<3x8x1x128xbf16>
    %11 = vector.shape_cast %10 : vector<3x8x1x128xbf16> to vector<3x8x128xbf16>
    %12 = arith.maximumf %9, %11 : vector<3x8x128xbf16>
    %13 = vector.extract_strided_slice %12 {offsets = [0, 0, 0], sizes = [3, 8, 64], strides = [1, 1, 1]} : vector<3x8x128xbf16> to vector<3x8x64xbf16>
    %14 = vector.extract_strided_slice %12 {offsets = [0, 0, 64], sizes = [3, 8, 64], strides = [1, 1, 1]} : vector<3x8x128xbf16> to vector<3x8x64xbf16>
    %15 = arith.maximumf %13, %14 : vector<3x8x64xbf16>
    %cst = arith.constant 0.000000e+00 : bf16
    %16 = vector.broadcast %cst : bf16 to vector<3x8x64xbf16>
    %17 = arith.maximumf %15, %16 : vector<3x8x64xbf16>
    %c0_8 = arith.constant 0 : index
    %c0_9 = arith.constant 0 : index
    %c0_10 = arith.constant 0 : index
    %18 = vector.load %arg4[%c0_8, %c0_9, %c0_10] : memref<3x8x64xbf16, #tpu.memory_space<vmem>>, vector<3x8x64xbf16>
    tpu.vector_store %arg4[%c0_8, %c0_9, %c0_10], %17 {strides = array<i32>} : memref<3x8x64xbf16, #tpu.memory_space<vmem>>, vector<3x8x64xbf16>,
    return
  }
  func.func @transform_0(%arg0: i32) -> (i32, i32, i32) {
    %c0_i32 = arith.constant 0 : i32
    %c0_i32_0 = arith.constant 0 : i32
    %c0_i32_1 = arith.constant 0 : i32
    return %arg0, %c0_i32, %c0_i32_0 : i32, i32, i32
  }
  func.func @transform_1(%arg0: i32) -> (i32, i32, i32) {
    %c0_i32 = arith.constant 0 : i32
    %c0_i32_0 = arith.constant 0 : i32
    %c0_i32_1 = arith.constant 0 : i32
    %c0_i32_2 = arith.constant 0 : i32
    return %c0_i32, %c0_i32_0, %c0_i32_1 : i32, i32, i32
  }
  func.func @transform_2(%arg0: i32) -> (i32, i32, i32) {
    %c0_i32 = arith.constant 0 : i32
    %c0_i32_0 = arith.constant 0 : i32
    %c0_i32_1 = arith.constant 0 : i32
    %c0_i32_2 = arith.constant 0 : i32
    return %c0_i32, %c0_i32_0, %c0_i32_1 : i32, i32, i32
  }
  func.func @transform_3(%arg0: i32) -> (i32, i32, i32) {
    %c0_i32 = arith.constant 0 : i32
    %c0_i32_0 = arith.constant 0 : i32
    %c0_i32_1 = arith.constant 0 : i32
    return %arg0, %c0_i32, %c0_i32_0 : i32, i32, i32
  }
}

</mosaic_0001>

<llo_original>
// kernel: time_distributed_conv2d.2
$region0: #{time_distributed_conv2d.2}
  #allocation0 [shape = 'u32[]', space=smem, size = 0x4, offset = 0x4, fixed_abs, tag = 'smem constant byte address 0x4 - core index']
  #allocation1 [shape = 'u32[72,128]{1,0:T(1,128)}', space=vmem, size = 0x9000, scoped, tag = 'internal scratch']
  %s0 = inlined_call_operand.vmem [shape: bf16[6,18,72], index: 0, kind: input, shape index: {}]
  %s1 = inlined_call_operand.vmem [shape: bf16[3,72,128], index: 1, kind: input, shape index: {}]
  %s2 = inlined_call_operand.vmem [shape: bf16[6,16,128], index: 2, kind: output, shape index: {0}]
  %s3 = inlined_call_operand.vmem [shape: f32[2,1,128], index: 3, kind: output, shape index: {1}]
  %s4 = inlined_call_operand.vmem [shape: f32[2,1,128], index: 4, kind: output, shape index: {2}]
  %5 = xla_tuple %s2, %s3, %s4
  %s6 = sld [smem:[#allocation0]]
  $region57: #{time_distributed_conv2d.2} parent=0
    _
  %s8 = ssub.s32 1, %s6
  %s9 = scalar_select 0, %s8, %s6
  loop: start=0, step=1, limit=4
  $region2: #{time_distributed_conv2d.2} parent=0 // loop_pre_header
    _
  $region3: #{time_distributed_conv2d.2} parent=0 // loop_header
    %s11 = sphi 0, %s15
    %p12 = scmp.ge.s32.totalorder %s11, 4
    %s21 = sphi 0, %s23
    %s24 = sphi 0, %s21
    %s25 = sphi 0, %s24
    %s41 = sphi 0, %s25
    %s45 = sphi 0, %s45
    %s47 = sphi 0, %s45
    %s48 = sphi 0, %s47
    %s62 = sphi 0, %s48
    %s68 = sphi 0, %s70
    %s71 = sphi 0, %s68
    %s72 = sphi 0, %s71
    %s88 = sphi 0, %s72
    %s94 = sphi 0, %s96
    %s97 = sphi 0, %s94
    %s98 = sphi 0, %s97
    %s114 = sphi 0, %s98
    %s120 = sphi 0, %s122
    %s123 = sphi 0, %s120
    %s124 = sphi 0, %s123
    %s140 = sphi 0, %s124
  $region4: #{time_distributed_conv2d.2} parent=0 // loop_header_branch
    %14 = sbr.rel (%p12) target = $region8
  $region5: #{time_distributed_conv2d.2} parent=0 // loop_body
    %s16 = ssub.s32 %s11, 1
    %s17 = ssub.s32 %s11, 2
    %s18 = sadd.s32 %s11, 1
    %s19 = ssub.s32 %s11, %s18
    %p20 = scmp.eq.s32.totalorder %s19, 0
    %s22 = sadd.s32 %s21, 1
    %s23 = scalar_select %p20, %s21, %s22
    %p26 = pneg %p20
    %p27 = scmp.eq.s32.totalorder %s11, 1
    %p28 = por %p26, %p27
    %p29 = scmp.ne.s32.totalorder %s21, %s24
    %p30 = scmp.eq.s32.totalorder %s11, 0
    %p31 = por %p29, %p30
    %p32 = scmp.ne.s32.totalorder %s21, %s24
    %p33 = scmp.eq.s32.totalorder %s16, 1
    %p34 = por %p32, %p33
    %p35 = scmp.ne.s32.totalorder %s24, %s25
    %p36 = scmp.eq.s32.totalorder %s16, 0
    %p37 = por %p35, %p36
    %p38 = scmp.ne.s32.totalorder %s24, %s25
    %p39 = scmp.eq.s32.totalorder %s17, 1
    %p40 = por %p38, %p39
    %p42 = scmp.ne.s32.totalorder %s25, %s41
    %p43 = scmp.eq.s32.totalorder %s17, 0
    %p44 = por %p42, %p43
    %s46 = sadd.s32 %s45, 1
    %p49 = scmp.eq.s32.totalorder %s11, 1
    %p50 = scmp.ne.s32.totalorder %s45, %s47
    %p51 = scmp.eq.s32.totalorder %s11, 0
    %p52 = por %p50, %p51
    %p53 = scmp.ne.s32.totalorder %s45, %s47
    %p54 = scmp.eq.s32.totalorder %s16, 1
    %p55 = por %p53, %p54
    %p56 = scmp.ne.s32.totalorder %s47, %s48
    %p57 = scmp.eq.s32.totalorder %s16, 0
    %p58 = por %p56, %p57
    %p59 = scmp.ne.s32.totalorder %s47, %s48
    %p60 = scmp.eq.s32.totalorder %s17, 1
    %p61 = por %p59, %p60
    %p63 = scmp.ne.s32.totalorder %s48, %s62
    %p64 = scmp.eq.s32.totalorder %s17, 0
    %p65 = por %p63, %p64
    %s66 = ssub.s32 %s11, %s18
    %p67 = scmp.eq.s32.totalorder %s66, 0
    %s69 = sadd.s32 %s68, 1
    %s70 = scalar_select %p67, %s68, %s69
    %p73 = pneg %p67
    %p74 = scmp.eq.s32.totalorder %s11, 1
    %p75 = por %p73, %p74
    %p76 = scmp.ne.s32.totalorder %s68, %s71
    %p77 = scmp.eq.s32.totalorder %s11, 0
    %p78 = por %p76, %p77
    %p79 = scmp.ne.s32.totalorder %s68, %s71
    %p80 = scmp.eq.s32.totalorder %s16, 1
    %p81 = por %p79, %p80
    %p82 = scmp.ne.s32.totalorder %s71, %s72
    %p83 = scmp.eq.s32.totalorder %s16, 0
    %p84 = por %p82, %p83
    %p85 = scmp.ne.s32.totalorder %s71, %s72
    %p86 = scmp.eq.s32.totalorder %s17, 1
    %p87 = por %p85, %p86
    %p89 = scmp.ne.s32.totalorder %s72, %s88
    %p90 = scmp.eq.s32.totalorder %s17, 0
    %p91 = por %p89, %p90
    %s92 = ssub.s32 %s11, %s18
    %p93 = scmp.eq.s32.totalorder %s92, 0
    %s95 = sadd.s32 %s94, 1
    %s96 = scalar_select %p93, %s94, %s95
    %p99 = pneg %p93
    %p100 = scmp.eq.s32.totalorder %s11, 1
    %p101 = por %p99, %p100
    %p102 = scmp.ne.s32.totalorder %s94, %s97
    %p103 = scmp.eq.s32.totalorder %s11, 0
    %p104 = por %p102, %p103
    %p105 = scmp.ne.s32.totalorder %s94, %s97
    %p106 = scmp.eq.s32.totalorder %s16, 1
    %p107 = por %p105, %p106
    %p108 = scmp.ne.s32.totalorder %s97, %s98
    %p109 = scmp.eq.s32.totalorder %s16, 0
    %p110 = por %p108, %p109
    %p111 = scmp.ne.s32.totalorder %s97, %s98
    %p112 = scmp.eq.s32.totalorder %s17, 1
    %p113 = por %p111, %p112
    %p115 = scmp.ne.s32.totalorder %s98, %s114
    %p116 = scmp.eq.s32.totalorder %s17, 0
    %p117 = por %p115, %p116
    %s118 = ssub.s32 %s11, %s18
    %p119 = scmp.eq.s32.totalorder %s118, 0
    %s121 = sadd.s32 %s120, 1
    %s122 = scalar_select %p119, %s120, %s121
    %p125 = pneg %p119
    %p126 = scmp.eq.s32.totalorder %s11, 1
    %p127 = por %p125, %p126
    %p128 = scmp.ne.s32.totalorder %s120, %s123
    %p129 = scmp.eq.s32.totalorder %s11, 0
    %p130 = por %p128, %p129
    %p131 = scmp.ne.s32.totalorder %s120, %s123
    %p132 = scmp.eq.s32.totalorder %s16, 1
    %p133 = por %p131, %p132
    %p134 = scmp.ne.s32.totalorder %s123, %s124
    %p135 = scmp.eq.s32.totalorder %s16, 0
    %p136 = por %p134, %p135
    %p137 = scmp.ne.s32.totalorder %s123, %s124
    %p138 = scmp.eq.s32.totalorder %s17, 1
    %p139 = por %p137, %p138
    %p141 = scmp.ne.s32.totalorder %s124, %s140
    %p142 = scmp.eq.s32.totalorder %s17, 0
    %p143 = por %p141, %p142
    %p144 = scmp.le.s32.totalorder 1, %s11
    %p145 = scmp.lt.s32.totalorder %s11, 3
    %p146 = pnand %p144, %p145
    %p147 = pneg %p146
    // Predicated region
    $region9: #{time_distributed_conv2d.2} parent=5 // pred_check
      _
    $region10: #{time_distributed_conv2d.2} parent=5 // pred_check_branch
      %149 = sbr.rel (%p146) target = $region12
    $region11: #{time_distributed_conv2d.2} parent=5 // pred_region
      %s150 = ssub.s32 %s11, 1
      // Predicated region
      $region13: #{time_distributed_conv2d.2} parent=11 // pred_check
        %p151 = pneg %p58
      $region14: #{time_distributed_conv2d.2} parent=11 // pred_check_branch
        %153 = sbr.rel (%p151) target = $region16
      $region15: #{time_distributed_conv2d.2} parent=11 // pred_region
        _
      $region16: #{time_distributed_conv2d.2} parent=11 // pred_fallthru
        _
    $region12: #{time_distributed_conv2d.2} parent=5 // pred_fallthru
      _
    %p154 = scmp.lt.s32.totalorder %s11, 2
    // Predicated region
    $region17: #{time_distributed_conv2d.2} parent=5 // pred_check
      %p155 = pneg %p154
    $region18: #{time_distributed_conv2d.2} parent=5 // pred_check_branch
      %157 = sbr.rel (%p155) target = $region20
    $region19: #{time_distributed_conv2d.2} parent=5 // pred_region
      // Predicated region
      $region21: #{time_distributed_conv2d.2} parent=19 // pred_check
        %p158 = pneg %p31
      $region22: #{time_distributed_conv2d.2} parent=19 // pred_check_branch
        %160 = sbr.rel (%p158) target = $region24
      $region23: #{time_distributed_conv2d.2} parent=19 // pred_region
        %s161 = smul.u32 3, %s11
        %p162 = scmp.lt.s32.totalorder %s161, 5
        %s163 = scalar_select %p162, %s161, 5
        %s164 = smul.addr %s163, 3
        %s165 = smul.addr %s164, 4
        %s166 = scalar_lea.vmem %s0, %s165
        %s167 = smul.u32 3, %s11
      $region24: #{time_distributed_conv2d.2} parent=19 // pred_fallthru
        _
    $region20: #{time_distributed_conv2d.2} parent=5 // pred_fallthru
      _
    %p168 = scmp.le.s32.totalorder 1, %s11
    %p169 = scmp.lt.s32.totalorder %s11, 3
    %p170 = pnand %p168, %p169
    %p171 = pneg %p170
    // Predicated region
    $region25: #{time_distributed_conv2d.2} parent=5 // pred_check
      _
    $region26: #{time_distributed_conv2d.2} parent=5 // pred_check_branch
      %173 = sbr.rel (%p170) target = $region28
    $region27: #{time_distributed_conv2d.2} parent=5 // pred_region
      %s174 = ssub.s32 %s11, 1
      %s175 = smul.u32 3, %s16
      %p176 = scmp.lt.s32.totalorder %s175, 5
      %s177 = scalar_select %p176, %s175, 5
      %s178 = smul.addr %s177, 3
      %s179 = smul.addr %s178, 4
      %s180 = scalar_lea.vmem %s0, %s179
      %p181 = pneg %p37
      %p182 = pneg %p34
      %p183 = pneg %p58
      %p184 = pneg %p55
      %p185 = pneg %p84
      %p186 = pneg %p81
      %s187 = smul.u32 3, %s16
      %p188 = scmp.lt.s32.totalorder %s187, 5
      %s189 = scalar_select %p188, %s187, 5
      %s190 = smul.addr %s189, 2
      %s191 = smul.addr %s190, 4
      %s192 = scalar_lea.vmem %s2, %s191
      %p193 = pneg %p110
      %p194 = pneg %p107
      %p195 = scmp.lt.s32.totalorder %s16, 1
      %s196 = scalar_select %p195, %s16, 1
      %s197 = scalar_lea.vmem %s3, %s196
      %p198 = pneg %p136
      %p199 = pneg %p133
      %p200 = scmp.lt.s32.totalorder %s16, 1
      %s201 = scalar_select %p200, %s16, 1
      %s202 = scalar_lea.vmem %s4, %s201
      %s203 = smul.u32 3, %s16
      %p204 = scmp.lt.s32.totalorder %s203, 5
      %s205 = scalar_select %p204, %s203, 5
      %s206 = smul.addr %s205, 3
      %s207 = smul.addr %s206, 4
      %s208 = scalar_lea.vmem %s0, %s207
      %s209 = smul.u32 3, %s16
      %s210 = smul.u32 3, %s16
      %p211 = scmp.lt.s32.totalorder %s210, 5
      %s212 = scalar_select %p211, %s210, 5
      %s213 = smul.addr %s212, 2
      %s214 = smul.addr %s213, 4
      %s215 = scalar_lea.vmem %s2, %s214
      %s216 = smul.u32 3, %s16
      %p217 = scmp.lt.s32.totalorder %s16, 1
      %s218 = scalar_select %p217, %s16, 1
      %s219 = scalar_lea.vmem %s3, %s218
      %p220 = scmp.lt.s32.totalorder %s16, 1
      %s221 = scalar_select %p220, %s16, 1
      %s222 = scalar_lea.vmem %s4, %s221
      %v224 = vld [vmem:[%s208] sm:$0xf]
      %v225 = vld [vmem:[%s208 + $0x4] sm:$0xf]
      %v226 = vld [vmem:[%s208 + $0xc] sm:$0xf]
      %v227 = vld [vmem:[%s208 + $0x10] sm:$0xf]
      %v228 = vld [vmem:[%s208 + $0x18] sm:$0xf]
      %v229 = vld [vmem:[%s208 + $0x1c] sm:$0xf]
      %v230 = vld [vmem:[%s1] sm:$0xf]
      %v231 = vld [vmem:[%s1 + $0x4] sm:$0xf]
      %v232 = vld [vmem:[%s1 + $0x8] sm:$0xf]
      %v233 = vld [vmem:[%s1 + $0xc] sm:$0xf]
      %v234 = vld [vmem:[%s1 + $0x10] sm:$0xf]
      %v235 = vld [vmem:[%s1 + $0x14] sm:$0xf]
      %v236 = vld [vmem:[%s1 + $0x18] sm:$0xf]
      %v237 = vld [vmem:[%s1 + $0x1c] sm:$0xf]
      %v238 = vld [vmem:[%s1 + $0x20] sm:$0xf]
      %v239 = vld [vmem:[%s208 + $0x8] sm:$0x1]
      %v240 = vld [vmem:[%s208 + $0x14] sm:$0x1]
      %v241 = vld [vmem:[%s208 + $0x20] sm:$0x1]
      %vm242 = vsmask.f32 3328
      %vm243 = vsmask.f32 7440
      %vm244 = vmor %vm242, %vm243
      %v246 = vshrl.u32 %v224, 16
      %v248 = vrot.slane %v246, 4
      %v249 = vshll.u32 %v224, 16
      %v251 = vrot.slane %v249, 5
      %v252 = vor.u32 %v248, %v251
      %v253 = vrot.slane %v252, 4
      %v255 = vshll.u32 %v225, 16
      %v257 = vrot.slane %v255, 5
      %v258 = vsel %vm244, %v253, %v257
      %v259 = vshrl.u32 %v225, 16
      %v261 = vrot.slane %v259, 4
      %v262 = vor.u32 %v261, %v257
      %v263 = vrot.slane %v262, 4
      %v265 = vshll.u32 %v239, 16
      %v267 = vrot.slane %v265, 5
      %v268 = vsel %vm244, %v263, %v267
      %v270 = vshrl.u32 %v226, 16
      %v272 = vrot.slane %v270, 4
      %v273 = vshll.u32 %v226, 16
      %v275 = vrot.slane %v273, 5
      %v276 = vor.u32 %v272, %v275
      %v277 = vrot.slane %v276, 4
      %v279 = vshll.u32 %v227, 16
      %v281 = vrot.slane %v279, 5
      %v282 = vsel %vm244, %v277, %v281
      %v283 = vshrl.u32 %v227, 16
      %v285 = vrot.slane %v283, 4
      %v286 = vor.u32 %v285, %v281
      %v287 = vrot.slane %v286, 4
      %v289 = vshll.u32 %v240, 16
      %v291 = vrot.slane %v289, 5
      %v292 = vsel %vm244, %v287, %v291
      %v294 = vshrl.u32 %v228, 16
      %v296 = vrot.slane %v294, 4
      %v297 = vshll.u32 %v228, 16
      %v299 = vrot.slane %v297, 5
      %v300 = vor.u32 %v296, %v299
      %v301 = vrot.slane %v300, 4
      %v303 = vshll.u32 %v229, 16
      %v305 = vrot.slane %v303, 5
      %v306 = vsel %vm244, %v301, %v305
      %v307 = vshrl.u32 %v229, 16
      %v309 = vrot.slane %v307, 4
      %v310 = vor.u32 %v309, %v305
      %v311 = vrot.slane %v310, 4
      %v313 = vshll.u32 %v241, 16
      %v315 = vrot.slane %v313, 5
      %v316 = vsel %vm244, %v311, %v315
      %s317 = scalar_lea.vmem %s1, 36
      %v318 = vld [vmem:[%s317] sm:$0xf]
      %v319 = vld [vmem:[%s317 + $0x4] sm:$0xf]
      %v320 = vld [vmem:[%s317 + $0x8] sm:$0xf]
      %v321 = vld [vmem:[%s317 + $0xc] sm:$0xf]
      %v322 = vld [vmem:[%s317 + $0x10] sm:$0xf]
      %v323 = vld [vmem:[%s317 + $0x14] sm:$0xf]
      %v324 = vld [vmem:[%s317 + $0x18] sm:$0xf]
      %v325 = vld [vmem:[%s317 + $0x1c] sm:$0xf]
      %v326 = vld [vmem:[%s317 + $0x20] sm:$0xf]
      %v327 = vunpack.c.l.b16 %v258
      %v328 = vunpack.c.l.b16 %v268
      %v329 = vunpack.c.l.b16 %v282
      %v330 = vunpack.c.l.b16 %v292
      %v331 = vunpack.c.l.b16 %v306
      %v332 = vunpack.c.l.b16 %v316
      %v333 = vpack.c.b16 %v328, %v327
      %v334 = vpack.c.b16 %v330, %v329
      %v335 = vpack.c.b16 %v332, %v331
      %v345 = vunpack.c.l.b16 %v318
      %v346 = vunpack.c.l.b16 %v319
      %v347 = vunpack.c.l.b16 %v320
      %v348 = vunpack.c.l.b16 %v321
      %v349 = vunpack.c.l.b16 %v322
      %v350 = vunpack.c.l.b16 %v323
      %v351 = vunpack.c.l.b16 %v324
      %v352 = vunpack.c.l.b16 %v325
      %v353 = vunpack.c.l.b16 %v326
      %v354 = vpack.c.b16 %v346, %v345
      %v355 = vpack.c.b16 %v348, %v347
      %v356 = vpack.c.b16 %v350, %v349
      %v357 = vpack.c.b16 %v352, %v351
      %v358 = vpack.c.b16 %v353, %v353
      %vm363 = vcmask 588800
      %v365 = vsel %vm363, %v333, 0
      %v368 = vsel %vm363, %v334, 0
      %v371 = vsel %vm363, %v335, 0
      %vm373 = vcmask 1043456
      %v375 = vsel %vm373, %v358, 0
      %377 = vmatpush.bf16.msra.mxu0 0
      %378 = vmatpush.bf16.msra.mxu0 0
      %379 = vmatpush.bf16.msra.mxu0 0
      %380 = vmatpush.bf16.msra.mxu0 %v375
      %381 = vmatpush.bf16.msra.mxu0 %v357
      %382 = vmatpush.bf16.msra.mxu0 %v356
      %383 = vmatpush.bf16.msra.mxu0 %v355
      %384 = vmatpush.bf16.msra.mxu0 %v354
      %385 = vmatmul.bf16.gmra.mxu0 %v365
      %v386 = vpop.f32.mrf.mxu0
      %v387 = vadd.f32 0.0, %v386
      %v388 = vpop.f32.mrf.mxu0
      %v389 = vadd.f32 0.0, %v388
      %390 = vmatmul.bf16.gmra.mxu0 %v368
      %v391 = vpop.f32.mrf.mxu0
      %v392 = vadd.f32 0.0, %v391
      %v393 = vpop.f32.mrf.mxu0
      %v394 = vadd.f32 0.0, %v393
      %395 = vmatmul.bf16.gmra.mxu0 %v371
      %v396 = vpop.f32.mrf.mxu0
      %v397 = vadd.f32 0.0, %v396
      %v398 = vpop.f32.mrf.mxu0
      %v399 = vadd.f32 0.0, %v398
      %400 = vdwg.mxu0
      %v407 = vunpack.c.l.b16 %v224
      %v408 = vunpack.c.l.b16 %v225
      %v409 = vunpack.c.l.b16 %v226
      %v410 = vunpack.c.l.b16 %v227
      %v411 = vunpack.c.l.b16 %v228
      %v412 = vunpack.c.l.b16 %v229
      %v413 = vpack.c.b16 %v408, %v407
      %v414 = vpack.c.b16 %v410, %v409
      %v415 = vpack.c.b16 %v412, %v411
      %v425 = vunpack.c.l.b16 %v230
      %v426 = vunpack.c.l.b16 %v231
      %v427 = vunpack.c.l.b16 %v232
      %v428 = vunpack.c.l.b16 %v233
      %v429 = vunpack.c.l.b16 %v234
      %v430 = vunpack.c.l.b16 %v235
      %v431 = vunpack.c.l.b16 %v236
      %v432 = vunpack.c.l.b16 %v237
      %v433 = vunpack.c.l.b16 %v238
      %v434 = vpack.c.b16 %v426, %v425
      %v435 = vpack.c.b16 %v428, %v427
      %v436 = vpack.c.b16 %v430, %v429
      %v437 = vpack.c.b16 %v432, %v431
      %v438 = vpack.c.b16 %v433, %v433
      %v444 = vsel %vm363, %v413, 0
      %v447 = vsel %vm363, %v414, 0
      %v450 = vsel %vm363, %v415, 0
      %v453 = vsel %vm373, %v438, 0
      %455 = vmatpush.bf16.msra.mxu0 0
      %456 = vmatpush.bf16.msra.mxu0 0
      %457 = vmatpush.bf16.msra.mxu0 0
      %458 = vmatpush.bf16.msra.mxu0 %v453
      %459 = vmatpush.bf16.msra.mxu0 %v437
      %460 = vmatpush.bf16.msra.mxu0 %v436
      %461 = vmatpush.bf16.msra.mxu0 %v435
      %462 = vmatpush.bf16.msra.mxu0 %v434
      %463 = vmatmul.bf16.gmra.mxu0 %v444
      %v464 = vpop.f32.mrf.mxu0
      %v465 = vadd.f32 %v387, %v464
      %v466 = vpop.f32.mrf.mxu0
      %v467 = vadd.f32 %v389, %v466
      %468 = vmatmul.bf16.gmra.mxu0 %v447
      %v469 = vpop.f32.mrf.mxu0
      %v470 = vadd.f32 %v392, %v469
      %v471 = vpop.f32.mrf.mxu0
      %v472 = vadd.f32 %v394, %v471
      %473 = vmatmul.bf16.gmra.mxu0 %v450
      %v474 = vpop.f32.mrf.mxu0
      %v475 = vadd.f32 %v397, %v474
      %v476 = vpop.f32.mrf.mxu0
      %v477 = vadd.f32 %v399, %v476
      %478 = vdwg.mxu0
      %v479 = vld [vmem:[%s208] sm:$0xe]
      %v480 = vld [vmem:[%s208 + $0xc] sm:$0xe]
      %v481 = vld [vmem:[%s208 + $0x18] sm:$0xe]
      %vm488 = vcmask 1042432
      %vm489 = vcmask 1046532
      %vm490 = vmor %vm488, %vm489
      %v491 = vrot.slane %v479, 5
      %v492 = vrot.slane %v491, 4
      %v493 = vrot.slane %v225, 5
      %v494 = vsel %vm490, %v492, %v493
      %v495 = vrot.slane %v493, 4
      %v496 = vrot.slane %v239, 5
      %v497 = vsel %vm490, %v495, %v496
      %v498 = vrot.slane %v480, 5
      %v499 = vrot.slane %v498, 4
      %v500 = vrot.slane %v227, 5
      %v501 = vsel %vm490, %v499, %v500
      %v502 = vrot.slane %v500, 4
      %v503 = vrot.slane %v240, 5
      %v504 = vsel %vm490, %v502, %v503
      %v505 = vrot.slane %v481, 5
      %v506 = vrot.slane %v505, 4
      %v507 = vrot.slane %v229, 5
      %v508 = vsel %vm490, %v506, %v507
      %v509 = vrot.slane %v507, 4
      %v510 = vrot.slane %v241, 5
      %v511 = vsel %vm490, %v509, %v510
      %s512 = scalar_lea.vmem %s1, 72
      %v513 = vld [vmem:[%s512] sm:$0xf]
      %v514 = vld [vmem:[%s512 + $0x4] sm:$0xf]
      %v515 = vld [vmem:[%s512 + $0x8] sm:$0xf]
      %v516 = vld [vmem:[%s512 + $0xc] sm:$0xf]
      %v517 = vld [vmem:[%s512 + $0x10] sm:$0xf]
      %v518 = vld [vmem:[%s512 + $0x14] sm:$0xf]
      %v519 = vld [vmem:[%s512 + $0x18] sm:$0xf]
      %v520 = vld [vmem:[%s512 + $0x1c] sm:$0xf]
      %v521 = vld [vmem:[%s512 + $0x20] sm:$0xf]
      %v522 = vunpack.c.l.b16 %v494
      %v523 = vunpack.c.l.b16 %v497
      %v524 = vunpack.c.l.b16 %v501
      %v525 = vunpack.c.l.b16 %v504
      %v526 = vunpack.c.l.b16 %v508
      %v527 = vunpack.c.l.b16 %v511
      %v528 = vpack.c.b16 %v523, %v522
      %v529 = vpack.c.b16 %v525, %v524
      %v530 = vpack.c.b16 %v527, %v526
      %v540 = vunpack.c.l.b16 %v513
      %v541 = vunpack.c.l.b16 %v514
      %v542 = vunpack.c.l.b16 %v515
      %v543 = vunpack.c.l.b16 %v516
      %v544 = vunpack.c.l.b16 %v517
      %v545 = vunpack.c.l.b16 %v518
      %v546 = vunpack.c.l.b16 %v519
      %v547 = vunpack.c.l.b16 %v520
      %v548 = vunpack.c.l.b16 %v521
      %v549 = vpack.c.b16 %v541, %v540
      %v550 = vpack.c.b16 %v543, %v542
      %v551 = vpack.c.b16 %v545, %v544
      %v552 = vpack.c.b16 %v547, %v546
      %v553 = vpack.c.b16 %v548, %v548
      %v559 = vsel %vm363, %v528, 0
      %v562 = vsel %vm363, %v529, 0
      %v565 = vsel %vm363, %v530, 0
      %v568 = vsel %vm373, %v553, 0
      %570 = vmatpush.bf16.msra.mxu0 0
      %571 = vmatpush.bf16.msra.mxu0 0
      %572 = vmatpush.bf16.msra.mxu0 0
      %573 = vmatpush.bf16.msra.mxu0 %v568
      %574 = vmatpush.bf16.msra.mxu0 %v552
      %575 = vmatpush.bf16.msra.mxu0 %v551
      %576 = vmatpush.bf16.msra.mxu0 %v550
      %577 = vmatpush.bf16.msra.mxu0 %v549
      %578 = vmatmul.bf16.gmra.mxu0 %v559
      %v579 = vpop.f32.mrf.mxu0
      %v580 = vadd.f32 0.0, %v579
      %v581 = vpop.f32.mrf.mxu0
      %v582 = vadd.f32 0.0, %v581
      %583 = vmatmul.bf16.gmra.mxu0 %v562
      %v584 = vpop.f32.mrf.mxu0
      %v585 = vadd.f32 0.0, %v584
      %v586 = vpop.f32.mrf.mxu0
      %v587 = vadd.f32 0.0, %v586
      %588 = vmatmul.bf16.gmra.mxu0 %v565
      %v589 = vpop.f32.mrf.mxu0
      %v590 = vadd.f32 0.0, %v589
      %v591 = vpop.f32.mrf.mxu0
      %v592 = vadd.f32 0.0, %v591
      %593 = vdwg.mxu0
      %v594 = vadd.f32 %v465, %v580
      %v595 = vadd.f32 %v467, %v582
      %v596 = vadd.f32 %v470, %v585
      %v597 = vadd.f32 %v472, %v587
      %v598 = vadd.f32 %v475, %v590
      %v599 = vadd.f32 %v477, %v592
      %v600 = vadd.f32 %v594, %v595
      %v601 = vadd.f32 %v600, %v596
      %v602 = vadd.f32 %v601, %v597
      %v603 = vadd.f32 %v602, %v598
      %v604 = vadd.f32 %v603, %v599
      %v605 = vrot.slane %v604, 4
      %v606 = vadd.f32 %v604, %v605
      %v607 = vrot.slane %v606, 2
      %v608 = vadd.f32 %v606, %v607
      %v609 = vrot.slane %v608, 1
      %v610 = vadd.f32 %v608, %v609
      %611 = vst [vmem:[%s219] sm:$0x1] %v610
      %v612 = vmul.f32 %v594, %v594
      %v613 = vmul.f32 %v595, %v595
      %v614 = vmul.f32 %v596, %v596
      %v615 = vmul.f32 %v597, %v597
      %v616 = vmul.f32 %v598, %v598
      %v617 = vmul.f32 %v599, %v599
      %v618 = vadd.f32 %v612, %v613
      %v619 = vadd.f32 %v618, %v614
      %v620 = vadd.f32 %v619, %v615
      %v621 = vadd.f32 %v620, %v616
      %v622 = vadd.f32 %v621, %v617
      %v623 = vrot.slane %v622, 4
      %v624 = vadd.f32 %v622, %v623
      %v625 = vrot.slane %v624, 2
      %v626 = vadd.f32 %v624, %v625
      %v627 = vrot.slane %v626, 1
      %v628 = vadd.f32 %v626, %v627
      %629 = vst [vmem:[%s222] sm:$0x1] %v628
      %v630 = vpack.c.bf16 %v594, %v594
      %v631 = vpack.c.bf16 %v595, %v595
      %v632 = vpack.c.bf16 %v596, %v596
      %v633 = vpack.c.bf16 %v597, %v597
      %v634 = vpack.c.bf16 %v598, %v598
      %v635 = vpack.c.bf16 %v599, %v599
      %636 = vst [vmem:[%s215] sm:$0xf] %v630
      %637 = vst [vmem:[%s215 + $0x4] sm:$0xf] %v631
      %638 = vst [vmem:[%s215 + $0x8] sm:$0xf] %v632
      %639 = vst [vmem:[%s215 + $0xc] sm:$0xf] %v633
      %640 = vst [vmem:[%s215 + $0x10] sm:$0xf] %v634
      %641 = vst [vmem:[%s215 + $0x14] sm:$0xf] %v635
      %s642 = smul.u32 3, %s16
      %p643 = scmp.lt.s32.totalorder %s642, 5
      %s644 = scalar_select %p643, %s642, 5
      %s645 = smul.addr %s644, 2
      %s646 = smul.addr %s645, 4
      %s647 = scalar_lea.vmem %s2, %s646
      %p648 = scmp.lt.s32.totalorder %s16, 1
      %s649 = scalar_select %p648, %s16, 1
      %s650 = scalar_lea.vmem %s3, %s649
      %p651 = scmp.lt.s32.totalorder %s16, 1
      %s652 = scalar_select %p651, %s16, 1
      %s653 = scalar_lea.vmem %s4, %s652
      // Predicated region
      $region29: #{time_distributed_conv2d.2} parent=27 // pred_check
        %p654 = pneg %p81
      $region30: #{time_distributed_conv2d.2} parent=27 // pred_check_branch
        %656 = sbr.rel (%p654) target = $region32
      $region31: #{time_distributed_conv2d.2} parent=27 // pred_region
        %s657 = smul.u32 3, %s16
      $region32: #{time_distributed_conv2d.2} parent=27 // pred_fallthru
        _
      // Predicated region
      $region33: #{time_distributed_conv2d.2} parent=27 // pred_check
        %p658 = pneg %p107
      $region34: #{time_distributed_conv2d.2} parent=27 // pred_check_branch
        %660 = sbr.rel (%p658) target = $region36
      $region35: #{time_distributed_conv2d.2} parent=27 // pred_region
        _
      $region36: #{time_distributed_conv2d.2} parent=27 // pred_fallthru
        _
      // Predicated region
      $region37: #{time_distributed_conv2d.2} parent=27 // pred_check
        %p661 = pneg %p133
      $region38: #{time_distributed_conv2d.2} parent=27 // pred_check_branch
        %663 = sbr.rel (%p661) target = $region40
      $region39: #{time_distributed_conv2d.2} parent=27 // pred_region
        _
      $region40: #{time_distributed_conv2d.2} parent=27 // pred_fallthru
        _
    $region28: #{time_distributed_conv2d.2} parent=5 // pred_fallthru
      _
    %p664 = scmp.le.s32.totalorder 2, %s11
    // Predicated region
    $region41: #{time_distributed_conv2d.2} parent=5 // pred_check
      %p665 = pneg %p664
    $region42: #{time_distributed_conv2d.2} parent=5 // pred_check_branch
      %667 = sbr.rel (%p665) target = $region44
    $region43: #{time_distributed_conv2d.2} parent=5 // pred_region
      %s668 = ssub.s32 %s11, 2
      // Predicated region
      $region45: #{time_distributed_conv2d.2} parent=43 // pred_check
        %p669 = pneg %p87
      $region46: #{time_distributed_conv2d.2} parent=43 // pred_check_branch
        %671 = sbr.rel (%p669) target = $region48
      $region47: #{time_distributed_conv2d.2} parent=43 // pred_region
        %s672 = smul.u32 3, %s17
        %p673 = scmp.lt.s32.totalorder %s672, 5
        %s674 = scalar_select %p673, %s672, 5
        %s675 = smul.addr %s674, 2
        %s676 = smul.addr %s675, 4
        %s677 = scalar_lea.vmem %s2, %s676
      $region48: #{time_distributed_conv2d.2} parent=43 // pred_fallthru
        _
      // Predicated region
      $region49: #{time_distributed_conv2d.2} parent=43 // pred_check
        %p678 = pneg %p113
      $region50: #{time_distributed_conv2d.2} parent=43 // pred_check_branch
        %680 = sbr.rel (%p678) target = $region52
      $region51: #{time_distributed_conv2d.2} parent=43 // pred_region
        %p681 = scmp.lt.s32.totalorder %s17, 1
        %s682 = scalar_select %p681, %s17, 1
        %s683 = scalar_lea.vmem %s3, %s682
      $region52: #{time_distributed_conv2d.2} parent=43 // pred_fallthru
        _
      // Predicated region
      $region53: #{time_distributed_conv2d.2} parent=43 // pred_check
        %p684 = pneg %p139
      $region54: #{time_distributed_conv2d.2} parent=43 // pred_check_branch
        %686 = sbr.rel (%p684) target = $region56
      $region55: #{time_distributed_conv2d.2} parent=43 // pred_region
        %p687 = scmp.lt.s32.totalorder %s17, 1
        %s688 = scalar_select %p687, %s17, 1
        %s689 = scalar_lea.vmem %s4, %s688
      $region56: #{time_distributed_conv2d.2} parent=43 // pred_fallthru
        _
    $region44: #{time_distributed_conv2d.2} parent=5 // pred_fallthru
      _
  $region6: #{time_distributed_conv2d.2} parent=0 // loop_footer
    %s15 = sadd.s32 1, %s11
  $region7: #{time_distributed_conv2d.2} parent=0 // loop_footer_branch
    %10 = sbr.rel target = $region3
  $region8: #{time_distributed_conv2d.2} parent=0 // loop_exit
    _

// kernel: time_distributed_conv2d.3
$region0: #{time_distributed_conv2d.3}
  #allocation0 [shape = 'u32[]', space=smem, size = 0x4, offset = 0x4, fixed_abs, tag = 'smem constant byte address 0x4 - core index']
  #allocation1 [shape = 'u32[72,128]{1,0:T(1,128)}', space=vmem, size = 0x9000, scoped, tag = 'internal scratch']
  %s0 = inlined_call_operand.vmem [shape: bf16[6,16,128], index: 0, kind: input, shape index: {}]
  %s1 = inlined_call_operand.vmem [shape: bf16[1,1,128], index: 1, kind: input, shape index: {}]
  %s2 = inlined_call_operand.vmem [shape: bf16[1,1,128], index: 2, kind: input, shape index: {}]
  %s3 = inlined_call_operand.vmem [shape: bf16[6,8,64], index: 3, kind: output, shape index: {}]
  %s4 = sld [smem:[#allocation0]]
  $region45: #{time_distributed_conv2d.3} parent=0
    _
  %s6 = ssub.s32 1, %s4
  %s7 = scalar_select 0, %s6, %s4
  loop: start=0, step=1, limit=4
  $region2: #{time_distributed_conv2d.3} parent=0 // loop_pre_header
    _
  $region3: #{time_distributed_conv2d.3} parent=0 // loop_header
    %s9 = sphi 0, %s13
    %p10 = scmp.ge.s32.totalorder %s9, 4
    %s19 = sphi 0, %s21
    %s22 = sphi 0, %s19
    %s23 = sphi 0, %s22
    %s39 = sphi 0, %s23
    %s43 = sphi 0, %s43
    %s45 = sphi 0, %s43
    %s46 = sphi 0, %s45
    %s60 = sphi 0, %s46
    %s64 = sphi 0, %s64
    %s66 = sphi 0, %s64
    %s67 = sphi 0, %s66
    %s81 = sphi 0, %s67
    %s87 = sphi 0, %s89
    %s90 = sphi 0, %s87
    %s91 = sphi 0, %s90
    %s107 = sphi 0, %s91
  $region4: #{time_distributed_conv2d.3} parent=0 // loop_header_branch
    %12 = sbr.rel (%p10) target = $region8
  $region5: #{time_distributed_conv2d.3} parent=0 // loop_body
    %s14 = ssub.s32 %s9, 1
    %s15 = ssub.s32 %s9, 2
    %s16 = sadd.s32 %s9, 1
    %s17 = ssub.s32 %s9, %s16
    %p18 = scmp.eq.s32.totalorder %s17, 0
    %s20 = sadd.s32 %s19, 1
    %s21 = scalar_select %p18, %s19, %s20
    %p24 = pneg %p18
    %p25 = scmp.eq.s32.totalorder %s9, 1
    %p26 = por %p24, %p25
    %p27 = scmp.ne.s32.totalorder %s19, %s22
    %p28 = scmp.eq.s32.totalorder %s9, 0
    %p29 = por %p27, %p28
    %p30 = scmp.ne.s32.totalorder %s19, %s22
    %p31 = scmp.eq.s32.totalorder %s14, 1
    %p32 = por %p30, %p31
    %p33 = scmp.ne.s32.totalorder %s22, %s23
    %p34 = scmp.eq.s32.totalorder %s14, 0
    %p35 = por %p33, %p34
    %p36 = scmp.ne.s32.totalorder %s22, %s23
    %p37 = scmp.eq.s32.totalorder %s15, 1
    %p38 = por %p36, %p37
    %p40 = scmp.ne.s32.totalorder %s23, %s39
    %p41 = scmp.eq.s32.totalorder %s15, 0
    %p42 = por %p40, %p41
    %s44 = sadd.s32 %s43, 1
    %p47 = scmp.eq.s32.totalorder %s9, 1
    %p48 = scmp.ne.s32.totalorder %s43, %s45
    %p49 = scmp.eq.s32.totalorder %s9, 0
    %p50 = por %p48, %p49
    %p51 = scmp.ne.s32.totalorder %s43, %s45
    %p52 = scmp.eq.s32.totalorder %s14, 1
    %p53 = por %p51, %p52
    %p54 = scmp.ne.s32.totalorder %s45, %s46
    %p55 = scmp.eq.s32.totalorder %s14, 0
    %p56 = por %p54, %p55
    %p57 = scmp.ne.s32.totalorder %s45, %s46
    %p58 = scmp.eq.s32.totalorder %s15, 1
    %p59 = por %p57, %p58
    %p61 = scmp.ne.s32.totalorder %s46, %s60
    %p62 = scmp.eq.s32.totalorder %s15, 0
    %p63 = por %p61, %p62
    %s65 = sadd.s32 %s64, 1
    %p68 = scmp.eq.s32.totalorder %s9, 1
    %p69 = scmp.ne.s32.totalorder %s64, %s66
    %p70 = scmp.eq.s32.totalorder %s9, 0
    %p71 = por %p69, %p70
    %p72 = scmp.ne.s32.totalorder %s64, %s66
    %p73 = scmp.eq.s32.totalorder %s14, 1
    %p74 = por %p72, %p73
    %p75 = scmp.ne.s32.totalorder %s66, %s67
    %p76 = scmp.eq.s32.totalorder %s14, 0
    %p77 = por %p75, %p76
    %p78 = scmp.ne.s32.totalorder %s66, %s67
    %p79 = scmp.eq.s32.totalorder %s15, 1
    %p80 = por %p78, %p79
    %p82 = scmp.ne.s32.totalorder %s67, %s81
    %p83 = scmp.eq.s32.totalorder %s15, 0
    %p84 = por %p82, %p83
    %s85 = ssub.s32 %s9, %s16
    %p86 = scmp.eq.s32.totalorder %s85, 0
    %s88 = sadd.s32 %s87, 1
    %s89 = scalar_select %p86, %s87, %s88
    %p92 = pneg %p86
    %p93 = scmp.eq.s32.totalorder %s9, 1
    %p94 = por %p92, %p93
    %p95 = scmp.ne.s32.totalorder %s87, %s90
    %p96 = scmp.eq.s32.totalorder %s9, 0
    %p97 = por %p95, %p96
    %p98 = scmp.ne.s32.totalorder %s87, %s90
    %p99 = scmp.eq.s32.totalorder %s14, 1
    %p100 = por %p98, %p99
    %p101 = scmp.ne.s32.totalorder %s90, %s91
    %p102 = scmp.eq.s32.totalorder %s14, 0
    %p103 = por %p101, %p102
    %p104 = scmp.ne.s32.totalorder %s90, %s91
    %p105 = scmp.eq.s32.totalorder %s15, 1
    %p106 = por %p104, %p105
    %p108 = scmp.ne.s32.totalorder %s91, %s107
    %p109 = scmp.eq.s32.totalorder %s15, 0
    %p110 = por %p108, %p109
    %p111 = scmp.le.s32.totalorder 1, %s9
    %p112 = scmp.lt.s32.totalorder %s9, 3
    %p113 = pnand %p111, %p112
    %p114 = pneg %p113
    // Predicated region
    $region9: #{time_distributed_conv2d.3} parent=5 // pred_check
      _
    $region10: #{time_distributed_conv2d.3} parent=5 // pred_check_branch
      %116 = sbr.rel (%p113) target = $region12
    $region11: #{time_distributed_conv2d.3} parent=5 // pred_region
      %s117 = ssub.s32 %s9, 1
      // Predicated region
      $region13: #{time_distributed_conv2d.3} parent=11 // pred_check
        %p118 = pneg %p56
      $region14: #{time_distributed_conv2d.3} parent=11 // pred_check_branch
        %120 = sbr.rel (%p118) target = $region16
      $region15: #{time_distributed_conv2d.3} parent=11 // pred_region
        _
      $region16: #{time_distributed_conv2d.3} parent=11 // pred_fallthru
        _
      // Predicated region
      $region17: #{time_distributed_conv2d.3} parent=11 // pred_check
        %p121 = pneg %p77
      $region18: #{time_distributed_conv2d.3} parent=11 // pred_check_branch
        %123 = sbr.rel (%p121) target = $region20
      $region19: #{time_distributed_conv2d.3} parent=11 // pred_region
        _
      $region20: #{time_distributed_conv2d.3} parent=11 // pred_fallthru
        _
    $region12: #{time_distributed_conv2d.3} parent=5 // pred_fallthru
      _
    %p124 = scmp.lt.s32.totalorder %s9, 2
    // Predicated region
    $region21: #{time_distributed_conv2d.3} parent=5 // pred_check
      %p125 = pneg %p124
    $region22: #{time_distributed_conv2d.3} parent=5 // pred_check_branch
      %127 = sbr.rel (%p125) target = $region24
    $region23: #{time_distributed_conv2d.3} parent=5 // pred_region
      // Predicated region
      $region25: #{time_distributed_conv2d.3} parent=23 // pred_check
        %p128 = pneg %p29
      $region26: #{time_distributed_conv2d.3} parent=23 // pred_check_branch
        %130 = sbr.rel (%p128) target = $region28
      $region27: #{time_distributed_conv2d.3} parent=23 // pred_region
        %s131 = smul.u32 3, %s9
        %p132 = scmp.lt.s32.totalorder %s131, 5
        %s133 = scalar_select %p132, %s131, 5
        %s134 = smul.addr %s133, 2
        %s135 = smul.addr %s134, 4
        %s136 = scalar_lea.vmem %s0, %s135
        %s137 = smul.u32 3, %s9
      $region28: #{time_distributed_conv2d.3} parent=23 // pred_fallthru
        _
    $region24: #{time_distributed_conv2d.3} parent=5 // pred_fallthru
      _
    %p138 = scmp.le.s32.totalorder 1, %s9
    %p139 = scmp.lt.s32.totalorder %s9, 3
    %p140 = pnand %p138, %p139
    %p141 = pneg %p140
    // Predicated region
    $region29: #{time_distributed_conv2d.3} parent=5 // pred_check
      _
    $region30: #{time_distributed_conv2d.3} parent=5 // pred_check_branch
      %143 = sbr.rel (%p140) target = $region32
    $region31: #{time_distributed_conv2d.3} parent=5 // pred_region
      %s144 = ssub.s32 %s9, 1
      %s145 = smul.u32 3, %s14
      %p146 = scmp.lt.s32.totalorder %s145, 5
      %s147 = scalar_select %p146, %s145, 5
      %s148 = smul.addr %s147, 2
      %s149 = smul.addr %s148, 4
      %s150 = scalar_lea.vmem %s0, %s149
      %p151 = pneg %p35
      %p152 = pneg %p32
      %p153 = pneg %p56
      %p154 = pneg %p53
      %p155 = pneg %p77
      %p156 = pneg %p74
      %p157 = pneg %p103
      %p158 = pneg %p100
      %s159 = smul.u32 3, %s14
      %p160 = scmp.lt.s32.totalorder %s159, 5
      %s161 = scalar_select %p160, %s159, 5
      %s162 = smul.addr %s161, 4
      %s163 = scalar_lea.vmem %s3, %s162
      %s164 = smul.u32 3, %s14
      %p165 = scmp.lt.s32.totalorder %s164, 5
      %s166 = scalar_select %p165, %s164, 5
      %s167 = smul.addr %s166, 2
      %s168 = smul.addr %s167, 4
      %s169 = scalar_lea.vmem %s0, %s168
      %s170 = smul.u32 3, %s14
      %s171 = smul.u32 3, %s14
      %p172 = scmp.lt.s32.totalorder %s171, 5
      %s173 = scalar_select %p172, %s171, 5
      %s174 = smul.addr %s173, 4
      %s175 = scalar_lea.vmem %s3, %s174
      %s176 = smul.u32 3, %s14
      %v177 = vld [vmem:[%s169] sm:$0xf]
      %v178 = vld [vmem:[%s169 + $0x4] sm:$0xf]
      %v179 = vld [vmem:[%s169 + $0x8] sm:$0xf]
      %v180 = vld [vmem:[%s169 + $0xc] sm:$0xf]
      %v181 = vld [vmem:[%s169 + $0x10] sm:$0xf]
      %v182 = vld [vmem:[%s169 + $0x14] sm:$0xf]
      %v183 = vld [vmem:[%s1] sm:$0x1]
      %v185 = vpack.i.b16 %v183, %v183
      %v187 = vperm.slane %v185, 0
      %v188 = vunpack.c.l.bf16 %v177
      %v189 = vunpack.c.l.bf16 %v178
      %v190 = vunpack.c.l.bf16 %v179
      %v191 = vunpack.c.l.bf16 %v180
      %v192 = vunpack.c.l.bf16 %v181
      %v193 = vunpack.c.l.bf16 %v182
      %v194 = vunpack.c.l.bf16 %v187
      %v195 = vmul.f32 %v188, %v194
      %v196 = vmul.f32 %v189, %v194
      %v197 = vmul.f32 %v190, %v194
      %v198 = vmul.f32 %v191, %v194
      %v199 = vmul.f32 %v192, %v194
      %v200 = vmul.f32 %v193, %v194
      %v201 = vpack.c.bf16 %v195, %v195
      %v202 = vpack.c.bf16 %v196, %v196
      %v203 = vpack.c.bf16 %v197, %v197
      %v204 = vpack.c.bf16 %v198, %v198
      %v205 = vpack.c.bf16 %v199, %v199
      %v206 = vpack.c.bf16 %v200, %v200
      %v207 = vld [vmem:[%s2] sm:$0x1]
      %v209 = vpack.i.b16 %v207, %v207
      %v211 = vperm.slane %v209, 0
      %v212 = vunpack.c.l.bf16 %v201
      %v213 = vunpack.c.l.bf16 %v202
      %v214 = vunpack.c.l.bf16 %v203
      %v215 = vunpack.c.l.bf16 %v204
      %v216 = vunpack.c.l.bf16 %v205
      %v217 = vunpack.c.l.bf16 %v206
      %v218 = vunpack.c.l.bf16 %v211
      %v219 = vadd.f32 %v212, %v218
      %v220 = vadd.f32 %v213, %v218
      %v221 = vadd.f32 %v214, %v218
      %v222 = vadd.f32 %v215, %v218
      %v223 = vadd.f32 %v216, %v218
      %v224 = vadd.f32 %v217, %v218
      %v225 = vpack.c.bf16 %v219, %v219
      %v226 = vpack.c.bf16 %v220, %v220
      %v227 = vpack.c.bf16 %v221, %v221
      %v228 = vpack.c.bf16 %v222, %v222
      %v229 = vpack.c.bf16 %v223, %v223
      %v230 = vpack.c.bf16 %v224, %v224
      %v237 = vrot.slane %v225, 3
      %v238 = vrot.slane %v226, 3
      %v239 = vrot.slane %v227, 3
      %v240 = vrot.slane %v228, 3
      %v241 = vrot.slane %v229, 3
      %v242 = vrot.slane %v230, 3
      %vm243 = vcmask 1040384
      %v246 = vsel %vm243, %v225, %v237
      %vm247 = vcmask 1041409
      %v248 = vsel %vm247, %v225, %v237
      %v250 = vrot.slane %v248, 1
      %vm251 = vcmask 1042434
      %v252 = vsel %vm251, %v225, %v237
      %v254 = vrot.slane %v252, 2
      %vm255 = vcmask 1043459
      %v256 = vsel %vm255, %v225, %v237
      %v258 = vrot.slane %v256, 3
      %v261 = vsel %vm243, %v226, %v238
      %v262 = vsel %vm247, %v226, %v238
      %v264 = vrot.slane %v262, 1
      %v265 = vsel %vm251, %v226, %v238
      %v267 = vrot.slane %v265, 2
      %v268 = vsel %vm255, %v226, %v238
      %v270 = vrot.slane %v268, 3
      %v273 = vsel %vm243, %v227, %v239
      %v274 = vsel %vm247, %v227, %v239
      %v276 = vrot.slane %v274, 1
      %v277 = vsel %vm251, %v227, %v239
      %v279 = vrot.slane %v277, 2
      %v280 = vsel %vm255, %v227, %v239
      %v282 = vrot.slane %v280, 3
      %v285 = vsel %vm243, %v228, %v240
      %v286 = vsel %vm247, %v228, %v240
      %v288 = vrot.slane %v286, 1
      %v289 = vsel %vm251, %v228, %v240
      %v291 = vrot.slane %v289, 2
      %v292 = vsel %vm255, %v228, %v240
      %v294 = vrot.slane %v292, 3
      %v297 = vsel %vm243, %v229, %v241
      %v298 = vsel %vm247, %v229, %v241
      %v300 = vrot.slane %v298, 1
      %v301 = vsel %vm251, %v229, %v241
      %v303 = vrot.slane %v301, 2
      %v304 = vsel %vm255, %v229, %v241
      %v306 = vrot.slane %v304, 3
      %v309 = vsel %vm243, %v230, %v242
      %v310 = vsel %vm247, %v230, %v242
      %v312 = vrot.slane %v310, 1
      %v313 = vsel %vm251, %v230, %v242
      %v315 = vrot.slane %v313, 2
      %v316 = vsel %vm255, %v230, %v242
      %v318 = vrot.slane %v316, 3
      %v343 = vunpack.c.l.bf16 %v246
      %v344 = vunpack.c.l.bf16 %v250
      %v345 = vunpack.c.l.bf16 %v254
      %v346 = vunpack.c.l.bf16 %v258
      %v347 = vunpack.c.l.bf16 %v261
      %v348 = vunpack.c.l.bf16 %v264
      %v349 = vunpack.c.l.bf16 %v267
      %v350 = vunpack.c.l.bf16 %v270
      %v351 = vunpack.c.l.bf16 %v273
      %v352 = vunpack.c.l.bf16 %v276
      %v353 = vunpack.c.l.bf16 %v279
      %v354 = vunpack.c.l.bf16 %v282
      %v355 = vunpack.c.l.bf16 %v285
      %v356 = vunpack.c.l.bf16 %v288
      %v357 = vunpack.c.l.bf16 %v291
      %v358 = vunpack.c.l.bf16 %v294
      %v359 = vunpack.c.l.bf16 %v297
      %v360 = vunpack.c.l.bf16 %v300
      %v361 = vunpack.c.l.bf16 %v303
      %v362 = vunpack.c.l.bf16 %v306
      %v363 = vunpack.c.l.bf16 %v309
      %v364 = vunpack.c.l.bf16 %v312
      %v365 = vunpack.c.l.bf16 %v315
      %v366 = vunpack.c.l.bf16 %v318
      %v391 = vrot.slane %v343, 7
      %v392 = vrot.slane %v391, 2
      %v393 = vrot.slane %v344, 7
      %v394 = vrot.slane %v393, 2
      %v395 = vrot.slane %v345, 7
      %v396 = vrot.slane %v395, 2
      %v397 = vrot.slane %v346, 7
      %v398 = vrot.slane %v397, 2
      %v399 = vrot.slane %v347, 7
      %v400 = vrot.slane %v399, 2
      %v401 = vrot.slane %v348, 7
      %v402 = vrot.slane %v401, 2
      %v403 = vrot.slane %v349, 7
      %v404 = vrot.slane %v403, 2
      %v405 = vrot.slane %v350, 7
      %v406 = vrot.slane %v405, 2
      %v407 = vrot.slane %v351, 7
      %v408 = vrot.slane %v407, 2
      %v409 = vrot.slane %v352, 7
      %v410 = vrot.slane %v409, 2
      %v411 = vrot.slane %v353, 7
      %v412 = vrot.slane %v411, 2
      %v413 = vrot.slane %v354, 7
      %v414 = vrot.slane %v413, 2
      %v415 = vrot.slane %v355, 7
      %v416 = vrot.slane %v415, 2
      %v417 = vrot.slane %v356, 7
      %v418 = vrot.slane %v417, 2
      %v419 = vrot.slane %v357, 7
      %v420 = vrot.slane %v419, 2
      %v421 = vrot.slane %v358, 7
      %v422 = vrot.slane %v421, 2
      %v423 = vrot.slane %v359, 7
      %v424 = vrot.slane %v423, 2
      %v425 = vrot.slane %v360, 7
      %v426 = vrot.slane %v425, 2
      %v427 = vrot.slane %v361, 7
      %v428 = vrot.slane %v427, 2
      %v429 = vrot.slane %v362, 7
      %v430 = vrot.slane %v429, 2
      %v431 = vrot.slane %v363, 7
      %v432 = vrot.slane %v431, 2
      %v433 = vrot.slane %v364, 7
      %v434 = vrot.slane %v433, 2
      %v435 = vrot.slane %v365, 7
      %v436 = vrot.slane %v435, 2
      %v437 = vrot.slane %v366, 7
      %v438 = vrot.slane %v437, 2
      %v463 = vmax.f32 %v343, %v392
      %v464 = vmax.f32 %v344, %v394
      %v465 = vmax.f32 %v345, %v396
      %v466 = vmax.f32 %v346, %v398
      %v467 = vmax.f32 %v347, %v400
      %v468 = vmax.f32 %v348, %v402
      %v469 = vmax.f32 %v349, %v404
      %v470 = vmax.f32 %v350, %v406
      %v471 = vmax.f32 %v351, %v408
      %v472 = vmax.f32 %v352, %v410
      %v473 = vmax.f32 %v353, %v412
      %v474 = vmax.f32 %v354, %v414
      %v475 = vmax.f32 %v355, %v416
      %v476 = vmax.f32 %v356, %v418
      %v477 = vmax.f32 %v357, %v420
      %v478 = vmax.f32 %v358, %v422
      %v479 = vmax.f32 %v359, %v424
      %v480 = vmax.f32 %v360, %v426
      %v481 = vmax.f32 %v361, %v428
      %v482 = vmax.f32 %v362, %v430
      %v483 = vmax.f32 %v363, %v432
      %v484 = vmax.f32 %v364, %v434
      %v485 = vmax.f32 %v365, %v436
      %v486 = vmax.f32 %v366, %v438
      %v487 = vpack.c.bf16 %v463, %v463
      %v488 = vpack.c.bf16 %v464, %v464
      %v489 = vpack.c.bf16 %v465, %v465
      %v490 = vpack.c.bf16 %v466, %v466
      %v491 = vpack.c.bf16 %v467, %v467
      %v492 = vpack.c.bf16 %v468, %v468
      %v493 = vpack.c.bf16 %v469, %v469
      %v494 = vpack.c.bf16 %v470, %v470
      %v495 = vpack.c.bf16 %v471, %v471
      %v496 = vpack.c.bf16 %v472, %v472
      %v497 = vpack.c.bf16 %v473, %v473
      %v498 = vpack.c.bf16 %v474, %v474
      %v499 = vpack.c.bf16 %v475, %v475
      %v500 = vpack.c.bf16 %v476, %v476
      %v501 = vpack.c.bf16 %v477, %v477
      %v502 = vpack.c.bf16 %v478, %v478
      %v503 = vpack.c.bf16 %v479, %v479
      %v504 = vpack.c.bf16 %v480, %v480
      %v505 = vpack.c.bf16 %v481, %v481
      %v506 = vpack.c.bf16 %v482, %v482
      %v507 = vpack.c.bf16 %v483, %v483
      %v508 = vpack.c.bf16 %v484, %v484
      %v509 = vpack.c.bf16 %v485, %v485
      %v510 = vpack.c.bf16 %v486, %v486
      %v511 = vunpack.c.l.bf16 %v487
      %v512 = vunpack.c.l.bf16 %v488
      %v513 = vunpack.c.l.bf16 %v489
      %v514 = vunpack.c.l.bf16 %v490
      %v515 = vunpack.c.l.bf16 %v491
      %v516 = vunpack.c.l.bf16 %v492
      %v517 = vunpack.c.l.bf16 %v493
      %v518 = vunpack.c.l.bf16 %v494
      %v519 = vunpack.c.l.bf16 %v495
      %v520 = vunpack.c.l.bf16 %v496
      %v521 = vunpack.c.l.bf16 %v497
      %v522 = vunpack.c.l.bf16 %v498
      %v523 = vunpack.c.l.bf16 %v499
      %v524 = vunpack.c.l.bf16 %v500
      %v525 = vunpack.c.l.bf16 %v501
      %v526 = vunpack.c.l.bf16 %v502
      %v527 = vunpack.c.l.bf16 %v503
      %v528 = vunpack.c.l.bf16 %v504
      %v529 = vunpack.c.l.bf16 %v505
      %v530 = vunpack.c.l.bf16 %v506
      %v531 = vunpack.c.l.bf16 %v507
      %v532 = vunpack.c.l.bf16 %v508
      %v533 = vunpack.c.l.bf16 %v509
      %v534 = vunpack.c.l.bf16 %v510
      %559 = vrot.lane.b32.xlu0 %v511, 64
      %v560 = vpop.permute.xlu0 %559
      %561 = vrot.lane.b32.xlu0 %v512, 64
      %v562 = vpop.permute.xlu0 %561
      %563 = vrot.lane.b32.xlu0 %v513, 64
      %v564 = vpop.permute.xlu0 %563
      %565 = vrot.lane.b32.xlu0 %v514, 64
      %v566 = vpop.permute.xlu0 %565
      %567 = vrot.lane.b32.xlu0 %v515, 64
      %v568 = vpop.permute.xlu0 %567
      %569 = vrot.lane.b32.xlu0 %v516, 64
      %v570 = vpop.permute.xlu0 %569
      %571 = vrot.lane.b32.xlu0 %v517, 64
      %v572 = vpop.permute.xlu0 %571
      %573 = vrot.lane.b32.xlu0 %v518, 64
      %v574 = vpop.permute.xlu0 %573
      %575 = vrot.lane.b32.xlu0 %v519, 64
      %v576 = vpop.permute.xlu0 %575
      %577 = vrot.lane.b32.xlu0 %v520, 64
      %v578 = vpop.permute.xlu0 %577
      %579 = vrot.lane.b32.xlu0 %v521, 64
      %v580 = vpop.permute.xlu0 %579
      %581 = vrot.lane.b32.xlu0 %v522, 64
      %v582 = vpop.permute.xlu0 %581
      %583 = vrot.lane.b32.xlu0 %v523, 64
      %v584 = vpop.permute.xlu0 %583
      %585 = vrot.lane.b32.xlu0 %v524, 64
      %v586 = vpop.permute.xlu0 %585
      %587 = vrot.lane.b32.xlu0 %v525, 64
      %v588 = vpop.permute.xlu0 %587
      %589 = vrot.lane.b32.xlu0 %v526, 64
      %v590 = vpop.permute.xlu0 %589
      %591 = vrot.lane.b32.xlu0 %v527, 64
      %v592 = vpop.permute.xlu0 %591
      %593 = vrot.lane.b32.xlu0 %v528, 64
      %v594 = vpop.permute.xlu0 %593
      %595 = vrot.lane.b32.xlu0 %v529, 64
      %v596 = vpop.permute.xlu0 %595
      %597 = vrot.lane.b32.xlu0 %v530, 64
      %v598 = vpop.permute.xlu0 %597
      %599 = vrot.lane.b32.xlu0 %v531, 64
      %v600 = vpop.permute.xlu0 %599
      %601 = vrot.lane.b32.xlu0 %v532, 64
      %v602 = vpop.permute.xlu0 %601
      %603 = vrot.lane.b32.xlu0 %v533, 64
      %v604 = vpop.permute.xlu0 %603
      %605 = vrot.lane.b32.xlu0 %v534, 64
      %v606 = vpop.permute.xlu0 %605
      %v631 = vmax.f32 %v511, %v560
      %v632 = vmax.f32 %v512, %v562
      %v633 = vmax.f32 %v513, %v564
      %v634 = vmax.f32 %v514, %v566
      %v635 = vmax.f32 %v515, %v568
      %v636 = vmax.f32 %v516, %v570
      %v637 = vmax.f32 %v517, %v572
      %v638 = vmax.f32 %v518, %v574
      %v639 = vmax.f32 %v519, %v576
      %v640 = vmax.f32 %v520, %v578
      %v641 = vmax.f32 %v521, %v580
      %v642 = vmax.f32 %v522, %v582
      %v643 = vmax.f32 %v523, %v584
      %v644 = vmax.f32 %v524, %v586
      %v645 = vmax.f32 %v525, %v588
      %v646 = vmax.f32 %v526, %v590
      %v647 = vmax.f32 %v527, %v592
      %v648 = vmax.f32 %v528, %v594
      %v649 = vmax.f32 %v529, %v596
      %v650 = vmax.f32 %v530, %v598
      %v651 = vmax.f32 %v531, %v600
      %v652 = vmax.f32 %v532, %v602
      %v653 = vmax.f32 %v533, %v604
      %v654 = vmax.f32 %v534, %v606
      %v655 = vpack.c.bf16 %v631, %v631
      %v656 = vpack.c.bf16 %v632, %v632
      %v657 = vpack.c.bf16 %v633, %v633
      %v658 = vpack.c.bf16 %v634, %v634
      %v659 = vpack.c.bf16 %v635, %v635
      %v660 = vpack.c.bf16 %v636, %v636
      %v661 = vpack.c.bf16 %v637, %v637
      %v662 = vpack.c.bf16 %v638, %v638
      %v663 = vpack.c.bf16 %v639, %v639
      %v664 = vpack.c.bf16 %v640, %v640
      %v665 = vpack.c.bf16 %v641, %v641
      %v666 = vpack.c.bf16 %v642, %v642
      %v667 = vpack.c.bf16 %v643, %v643
      %v668 = vpack.c.bf16 %v644, %v644
      %v669 = vpack.c.bf16 %v645, %v645
      %v670 = vpack.c.bf16 %v646, %v646
      %v671 = vpack.c.bf16 %v647, %v647
      %v672 = vpack.c.bf16 %v648, %v648
      %v673 = vpack.c.bf16 %v649, %v649
      %v674 = vpack.c.bf16 %v650, %v650
      %v675 = vpack.c.bf16 %v651, %v651
      %v676 = vpack.c.bf16 %v652, %v652
      %v677 = vpack.c.bf16 %v653, %v653
      %v678 = vpack.c.bf16 %v654, %v654
      %v679 = vunpack.c.l.bf16 %v655
      %v680 = vunpack.c.l.bf16 %v656
      %v681 = vunpack.c.l.bf16 %v657
      %v682 = vunpack.c.l.bf16 %v658
      %v683 = vunpack.c.l.bf16 %v659
      %v684 = vunpack.c.l.bf16 %v660
      %v685 = vunpack.c.l.bf16 %v661
      %v686 = vunpack.c.l.bf16 %v662
      %v687 = vunpack.c.l.bf16 %v663
      %v688 = vunpack.c.l.bf16 %v664
      %v689 = vunpack.c.l.bf16 %v665
      %v690 = vunpack.c.l.bf16 %v666
      %v691 = vunpack.c.l.bf16 %v667
      %v692 = vunpack.c.l.bf16 %v668
      %v693 = vunpack.c.l.bf16 %v669
      %v694 = vunpack.c.l.bf16 %v670
      %v695 = vunpack.c.l.bf16 %v671
      %v696 = vunpack.c.l.bf16 %v672
      %v697 = vunpack.c.l.bf16 %v673
      %v698 = vunpack.c.l.bf16 %v674
      %v699 = vunpack.c.l.bf16 %v675
      %v700 = vunpack.c.l.bf16 %v676
      %v701 = vunpack.c.l.bf16 %v677
      %v702 = vunpack.c.l.bf16 %v678
      %v703 = vmax.f32 %v679, 0.0
      %v704 = vmax.f32 %v680, 0.0
      %v705 = vmax.f32 %v681, 0.0
      %v706 = vmax.f32 %v682, 0.0
      %v707 = vmax.f32 %v683, 0.0
      %v708 = vmax.f32 %v684, 0.0
      %v709 = vmax.f32 %v685, 0.0
      %v710 = vmax.f32 %v686, 0.0
      %v711 = vmax.f32 %v687, 0.0
      %v712 = vmax.f32 %v688, 0.0
      %v713 = vmax.f32 %v689, 0.0
      %v714 = vmax.f32 %v690, 0.0
      %v715 = vmax.f32 %v691, 0.0
      %v716 = vmax.f32 %v692, 0.0
      %v717 = vmax.f32 %v693, 0.0
      %v718 = vmax.f32 %v694, 0.0
      %v719 = vmax.f32 %v695, 0.0
      %v720 = vmax.f32 %v696, 0.0
      %v721 = vmax.f32 %v697, 0.0
      %v722 = vmax.f32 %v698, 0.0
      %v723 = vmax.f32 %v699, 0.0
      %v724 = vmax.f32 %v700, 0.0
      %v725 = vmax.f32 %v701, 0.0
      %v726 = vmax.f32 %v702, 0.0
      %v727 = vpack.c.bf16 %v703, %v703
      %v728 = vpack.c.bf16 %v704, %v704
      %v729 = vpack.c.bf16 %v705, %v705
      %v730 = vpack.c.bf16 %v706, %v706
      %v731 = vpack.c.bf16 %v707, %v707
      %v732 = vpack.c.bf16 %v708, %v708
      %v733 = vpack.c.bf16 %v709, %v709
      %v734 = vpack.c.bf16 %v710, %v710
      %v735 = vpack.c.bf16 %v711, %v711
      %v736 = vpack.c.bf16 %v712, %v712
      %v737 = vpack.c.bf16 %v713, %v713
      %v738 = vpack.c.bf16 %v714, %v714
      %v739 = vpack.c.bf16 %v715, %v715
      %v740 = vpack.c.bf16 %v716, %v716
      %v741 = vpack.c.bf16 %v717, %v717
      %v742 = vpack.c.bf16 %v718, %v718
      %v743 = vpack.c.bf16 %v719, %v719
      %v744 = vpack.c.bf16 %v720, %v720
      %v745 = vpack.c.bf16 %v721, %v721
      %v746 = vpack.c.bf16 %v722, %v722
      %v747 = vpack.c.bf16 %v723, %v723
      %v748 = vpack.c.bf16 %v724, %v724
      %v749 = vpack.c.bf16 %v725, %v725
      %v750 = vpack.c.bf16 %v726, %v726
      %v775 = vunpack.c.l.b16 %v727
      %v776 = vunpack.c.l.b16 %v728
      %v777 = vunpack.c.l.b16 %v729
      %v778 = vunpack.c.l.b16 %v730
      %v779 = vunpack.c.l.b16 %v731
      %v780 = vunpack.c.l.b16 %v732
      %v781 = vunpack.c.l.b16 %v733
      %v782 = vunpack.c.l.b16 %v734
      %v783 = vunpack.c.l.b16 %v735
      %v784 = vunpack.c.l.b16 %v736
      %v785 = vunpack.c.l.b16 %v737
      %v786 = vunpack.c.l.b16 %v738
      %v787 = vunpack.c.l.b16 %v739
      %v788 = vunpack.c.l.b16 %v740
      %v789 = vunpack.c.l.b16 %v741
      %v790 = vunpack.c.l.b16 %v742
      %v791 = vunpack.c.l.b16 %v743
      %v792 = vunpack.c.l.b16 %v744
      %v793 = vunpack.c.l.b16 %v745
      %v794 = vunpack.c.l.b16 %v746
      %v795 = vunpack.c.l.b16 %v747
      %v796 = vunpack.c.l.b16 %v748
      %v797 = vunpack.c.l.b16 %v749
      %v798 = vunpack.c.l.b16 %v750
      %v799 = vrot.slane %v776, 7
      %v800 = vsel %vm247, %v799, %v775
      %v801 = vrot.slane %v777, 6
      %v802 = vsel %vm251, %v801, %v800
      %v803 = vrot.slane %v778, 5
      %v804 = vsel %vm255, %v803, %v802
      %v805 = vrot.slane %v779, 4
      %vm806 = vcmask 1044484
      %v807 = vsel %vm806, %v805, %v804
      %v808 = vrot.slane %v780, 3
      %vm809 = vcmask 1045509
      %v810 = vsel %vm809, %v808, %v807
      %v811 = vrot.slane %v781, 2
      %vm812 = vcmask 1046534
      %v813 = vsel %vm812, %v811, %v810
      %v814 = vrot.slane %v782, 1
      %vm815 = vcmask 1047559
      %v816 = vsel %vm815, %v814, %v813
      %v817 = vrot.slane %v784, 7
      %v818 = vsel %vm247, %v817, %v783
      %v819 = vrot.slane %v785, 6
      %v820 = vsel %vm251, %v819, %v818
      %v821 = vrot.slane %v786, 5
      %v822 = vsel %vm255, %v821, %v820
      %v823 = vrot.slane %v787, 4
      %v824 = vsel %vm806, %v823, %v822
      %v825 = vrot.slane %v788, 3
      %v826 = vsel %vm809, %v825, %v824
      %v827 = vrot.slane %v789, 2
      %v828 = vsel %vm812, %v827, %v826
      %v829 = vrot.slane %v790, 1
      %v830 = vsel %vm815, %v829, %v828
      %v831 = vrot.slane %v792, 7
      %v832 = vsel %vm247, %v831, %v791
      %v833 = vrot.slane %v793, 6
      %v834 = vsel %vm251, %v833, %v832
      %v835 = vrot.slane %v794, 5
      %v836 = vsel %vm255, %v835, %v834
      %v837 = vrot.slane %v795, 4
      %v838 = vsel %vm806, %v837, %v836
      %v839 = vrot.slane %v796, 3
      %v840 = vsel %vm809, %v839, %v838
      %v841 = vrot.slane %v797, 2
      %v842 = vsel %vm812, %v841, %v840
      %v843 = vrot.slane %v798, 1
      %v844 = vsel %vm815, %v843, %v842
      %v845 = vpack.c.b16 %v816, %v816
      %v846 = vpack.c.b16 %v830, %v830
      %v847 = vpack.c.b16 %v844, %v844
      %vm851 = vcmask 519168
      %852 = vst.msk [vmem:[%s175] sm:$0xf] %vm851, %v845
      %853 = vst.msk [vmem:[%s175 + $0x4] sm:$0xf] %vm851, %v846
      %854 = vst.msk [vmem:[%s175 + $0x8] sm:$0xf] %vm851, %v847
      %s855 = smul.u32 3, %s14
      %p856 = scmp.lt.s32.totalorder %s855, 5
      %s857 = scalar_select %p856, %s855, 5
      %s858 = smul.addr %s857, 4
      %s859 = scalar_lea.vmem %s3, %s858
      // Predicated region
      $region33: #{time_distributed_conv2d.3} parent=31 // pred_check
        %p860 = pneg %p100
      $region34: #{time_distributed_conv2d.3} parent=31 // pred_check_branch
        %862 = sbr.rel (%p860) target = $region36
      $region35: #{time_distributed_conv2d.3} parent=31 // pred_region
        %s863 = smul.u32 3, %s14
      $region36: #{time_distributed_conv2d.3} parent=31 // pred_fallthru
        _
    $region32: #{time_distributed_conv2d.3} parent=5 // pred_fallthru
      _
    %p864 = scmp.le.s32.totalorder 2, %s9
    // Predicated region
    $region37: #{time_distributed_conv2d.3} parent=5 // pred_check
      %p865 = pneg %p864
    $region38: #{time_distributed_conv2d.3} parent=5 // pred_check_branch
      %867 = sbr.rel (%p865) target = $region40
    $region39: #{time_distributed_conv2d.3} parent=5 // pred_region
      %s868 = ssub.s32 %s9, 2
      // Predicated region
      $region41: #{time_distributed_conv2d.3} parent=39 // pred_check
        %p869 = pneg %p106
      $region42: #{time_distributed_conv2d.3} parent=39 // pred_check_branch
        %871 = sbr.rel (%p869) target = $region44
      $region43: #{time_distributed_conv2d.3} parent=39 // pred_region
        %s872 = smul.u32 3, %s15
        %p873 = scmp.lt.s32.totalorder %s872, 5
        %s874 = scalar_select %p873, %s872, 5
        %s875 = smul.addr %s874, 4
        %s876 = scalar_lea.vmem %s3, %s875
      $region44: #{time_distributed_conv2d.3} parent=39 // pred_fallthru
        _
    $region40: #{time_distributed_conv2d.3} parent=5 // pred_fallthru
      _
  $region6: #{time_distributed_conv2d.3} parent=0 // loop_footer
    %s13 = sadd.s32 1, %s9
  $region7: #{time_distributed_conv2d.3} parent=0 // loop_footer_branch
    %8 = sbr.rel target = $region3
  $region8: #{time_distributed_conv2d.3} parent=0 // loop_exit
    _

</llo_original>
